<compile_context>
chip_gen: v5e
topology: v5e:2x2
jax: 0.10.0
libtpu: 0.0.40
codegen_flags: <defaults>
</compile_context>

<pallas_src>
import functools
import numpy as np
import jax
import jax.numpy as jnp
from jax.experimental import pallas as pl
from jax.experimental.pallas import tpu as pltpu

BN_EPS = 1e-5
# TODO(synk): PyTorch BatchNorm2d in train mode uses batch statistics; here we use
# eval-mode running stats (mean=0, var=1, gamma=1, beta=0) for determinism, folded
# into the matmul epilogue as a per-channel scale.
BN_SCALE = 1.0 / np.sqrt(1.0 + BN_EPS)


def _default_vmem_limit():
    # v7x has only 64 MiB VMEM / TensorCore; v5e/v6e have 128 MiB.  Budget ~3/4 of
    # physical (96 MiB on v5e/v6e, 48 MiB on v7x); conservative 48 MiB fallback.
    try:
        info = pltpu.get_tpu_info()
        cap = getattr(info, "vmem_capacity_bytes", None)
        if cap:
            return int(min(cap * 3 // 4, 96 * 1024 * 1024))
    except Exception:
        pass
    return 48 * 1024 * 1024


VMEM_LIMIT = _default_vmem_limit()


# ----------------------------- tiling helpers -------------------------------

def _tile_m(M):
    """Pick (Mp, tm): prefer a divisor of M (no pad copy, no output slice)."""
    if M <= 1024:
        return M, M
    for t in (1024, 896, 768, 640, 512, 448, 384, 320, 256, 224, 192, 160,
              128, 112, 96, 80, 64, 56, 48, 40, 32, 24, 16, 8):
        if M % t == 0:
            return M, t
    Mp = ((M + 255) // 256) * 256
    return Mp, 256


def _tile_k(K):
    if K % 128 != 0:
        return K                      # single K step (e.g. K=147, 576)
    for t in (512, 384, 256, 128):
        if K % t == 0:
            return t
    return K


def _tile_n(N):
    if N <= 768:
        return N                      # single lane-resident N step
    for t in (512, 384, 256, 128):
        if N % t == 0:
            return t
    return N


# ----------------------------- Pallas kernels ------------------------------

def _matmul_affine_acc_kernel(a_ref, b_ref, s_ref, t_ref, o_ref, acc_ref, *, act):
    """o = act((a @ b) * s + t), accumulated over the K grid axis."""
    @pl.when(pl.program_id(2) == 0)
    def _init():
        acc_ref[...] = jnp.zeros_like(acc_ref)

    acc_ref[...] += jnp.dot(a_ref[...], b_ref[...],
                            preferred_element_type=jnp.float32)

    @pl.when(pl.program_id(2) == pl.num_programs(2) - 1)
    def _fin():
        y = acc_ref[...] * s_ref[...] + t_ref[...]
        if act == "relu":
            y = jnp.maximum(y, 0.0)
        elif act == "sigmoid":
            y = jax.nn.sigmoid(y)
        o_ref[...] = y.astype(o_ref.dtype)


def _matmul_affine_single_kernel(a_ref, b_ref, s_ref, t_ref, o_ref, *, act):
    """Single-K-step variant: no VMEM accumulator scratch round trip."""
    y = jnp.dot(a_ref[...], b_ref[...], preferred_element_type=jnp.float32)
    y = y * s_ref[...] + t_ref[...]
    if act == "relu":
        y = jnp.maximum(y, 0.0)
    elif act == "sigmoid":
        y = jax.nn.sigmoid(y)
    o_ref[...] = y.astype(o_ref.dtype)


def _gmean_kernel(x_ref, o_ref):
    o_ref[...] = jnp.mean(x_ref[...], axis=1, keepdims=True)


def _se_fused_kernel(x_ref, r_ref, w1_ref, b1_ref, w2_ref, b2_ref, o_ref):
    """Fused SE: pooled->fc1+relu->fc2+sigmoid->scale + residual + relu."""
    x = x_ref[0]                                           # (HW, C) f32
    pooled = jnp.mean(x, axis=0, keepdims=True)            # (1, C)
    h1 = jnp.maximum(
        jnp.dot(pooled, w1_ref[...], preferred_element_type=jnp.float32)
        + b1_ref[...], 0.0)                                # (1, R)
    s = jax.nn.sigmoid(
        jnp.dot(h1, w2_ref[...], preferred_element_type=jnp.float32)
        + b2_ref[...])                                     # (1, C)
    o_ref[0] = jnp.maximum(x * s + r_ref[0], 0.0)


def _fma_kernel(m_ref, s_ref, n_ref, o_ref):
    o_ref[...] = m_ref[...] + s_ref[...] * n_ref[...]


def _maxpool_parity_kernel(x_ref, o_ref, *, k, Ho, Wo):
    """x_ref: (1, 4, Hp2, Wp2, C) parity-split padded input; window max."""
    acc = None
    for ki in range(k):
        for kj in range(k):
            p = (ki % 2) * 2 + (kj % 2)
            blk = x_ref[0, p, ki // 2:ki // 2 + Ho, kj // 2:kj // 2 + Wo, :]
            acc = blk if acc is None else jnp.maximum(acc, blk)
    o_ref[0] = acc


# --------------------------- jitted op wrappers -----------------------------

def _matmul_affine(a, b, scale, bias, act):
    M, K = a.shape
    K2, N = b.shape
    assert K == K2
    a = a.astype(jnp.bfloat16)        # bf16 MXU operands, f32 accumulation
    b = b.astype(jnp.bfloat16)
    Mp, tm = _tile_m(M)
    if Mp != M:
        a = jnp.pad(a, ((0, Mp - M), (0, 0)))
    tk = _tile_k(K)
    tn = _tile_n(N)
    nm, nn, nk = Mp // tm, N // tn, K // tk
    s2 = scale.reshape(1, N).astype(jnp.float32)
    t2 = bias.reshape(1, N).astype(jnp.float32)

    if nk == 1:
        out = pl.pallas_call(
            functools.partial(_matmul_affine_single_kernel, act=act),
            out_shape=jax.ShapeDtypeStruct((Mp, N), jnp.float32),
            grid=(nm, nn),
            in_specs=[
                pl.BlockSpec((tm, tk), lambda i, j: (i, 0)),
                pl.BlockSpec((tk, tn), lambda i, j: (0, j)),
                pl.BlockSpec((1, tn), lambda i, j: (0, j)),
                pl.BlockSpec((1, tn), lambda i, j: (0, j)),
            ],
            out_specs=pl.BlockSpec((tm, tn), lambda i, j: (i, j)),
            compiler_params=pltpu.CompilerParams(
                dimension_semantics=("parallel", "parallel"),
                vmem_limit_bytes=VMEM_LIMIT),
        )(a, b, s2, t2)
    else:
        out = pl.pallas_call(
            functools.partial(_matmul_affine_acc_kernel, act=act),
            out_shape=jax.ShapeDtypeStruct((Mp, N), jnp.float32),
            grid=(nm, nn, nk),
            in_specs=[
                pl.BlockSpec((tm, tk), lambda i, j, k: (i, k)),
                pl.BlockSpec((tk, tn), lambda i, j, k: (k, j)),
                pl.BlockSpec((1, tn), lambda i, j, k: (0, j)),
                pl.BlockSpec((1, tn), lambda i, j, k: (0, j)),
            ],
            out_specs=pl.BlockSpec((tm, tn), lambda i, j, k: (i, j)),
            scratch_shapes=[pltpu.VMEM((tm, tn), jnp.float32)],
            compiler_params=pltpu.CompilerParams(
                dimension_semantics=("parallel", "parallel", "arbitrary"),
                vmem_limit_bytes=VMEM_LIMIT),
        )(a, b, s2, t2)
    return out if Mp == M else out[:M]


@functools.partial(jax.jit, static_argnames=("k", "stride", "pad", "act"))
def conv2d(x, w, scale, bias, *, k, stride, pad, act):
    """NHWC conv as im2col (bf16, JAX slicing glue) + Pallas GEMM w/ fused BN+act."""
    B, H, W, Cin = x.shape
    Cout = w.shape[-1]
    xb = x.astype(jnp.bfloat16)
    xp = jnp.pad(xb, ((0, 0), (pad, pad), (pad, pad), (0, 0))) if pad > 0 else xb
    Ho = (H + 2 * pad - k) // stride + 1
    Wo = (W + 2 * pad - k) // stride + 1
    if k == 1:
        sl = xp if stride == 1 else xp[:, :stride * Ho:stride, :stride * Wo:stride, :]
        a = sl.reshape(B * Ho * Wo, Cin)
    else:
        # TODO(synk): im2col is still materialized in HBM (in bf16); a fully
        # de-materialized direct conv needs in-kernel halo windowing.
        cols = [xp[:, ki:ki + stride * Ho:stride, kj:kj + stride * Wo:stride, :]
                for ki in range(k) for kj in range(k)]
        a = jnp.concatenate(cols, axis=-1).reshape(B * Ho * Wo, k * k * Cin)
    out = _matmul_affine(a, w.reshape(k * k * Cin, Cout), scale, bias, act)
    return out.reshape(B, Ho, Wo, Cout)


@functools.partial(jax.jit, static_argnames=("act",))
def dense(x, w, scale, bias, *, act):
    return _matmul_affine(x, w, scale, bias, act)


@jax.jit
def _global_mean_flat(x):
    B, HW, C = x.shape
    out = pl.pallas_call(
        _gmean_kernel,
        out_shape=jax.ShapeDtypeStruct((B, 1, C), jnp.float32),
        grid=(B,),
        in_specs=[pl.BlockSpec((1, HW, C), lambda b: (b, 0, 0))],
        out_specs=pl.BlockSpec((1, 1, C), lambda b: (b, 0, 0)),
        compiler_params=pltpu.CompilerParams(
            dimension_semantics=("parallel",), vmem_limit_bytes=VMEM_LIMIT),
    )(x.astype(jnp.float32))
    return out[:, 0, :]


def global_mean(x_nhwc):
    B, H, W, C = x_nhwc.shape
    return _global_mean_flat(x_nhwc.reshape(B, H * W, C))


@jax.jit
def se_excite_residual_relu(x_flat, res_flat, w1, b1, w2, b2):
    """Fused SE module + residual + relu.  x/res: (B, HW, C)."""
    B, HW, C = x_flat.shape
    R = w1.shape[-1]
    return pl.pallas_call(
        _se_fused_kernel,
        out_shape=jax.ShapeDtypeStruct((B, HW, C), jnp.float32),
        grid=(B,),
        in_specs=[
            pl.BlockSpec((1, HW, C), lambda b: (b, 0, 0)),
            pl.BlockSpec((1, HW, C), lambda b: (b, 0, 0)),
            pl.BlockSpec((C, R), lambda b: (0, 0)),
            pl.BlockSpec((1, R), lambda b: (0, 0)),
            pl.BlockSpec((R, C), lambda b: (0, 0)),
            pl.BlockSpec((1, C), lambda b: (0, 0)),
        ],
        out_specs=pl.BlockSpec((1, HW, C), lambda b: (b, 0, 0)),
        compiler_params=pltpu.CompilerParams(
            dimension_semantics=("parallel",), vmem_limit_bytes=VMEM_LIMIT),
    )(x_flat, res_flat, w1.astype(jnp.float32), b1.reshape(1, R).astype(jnp.float32),
      w2.astype(jnp.float32), b2.reshape(1, C).astype(jnp.float32))


@jax.jit
def add_scaled_noise(mean, std_ext, noise):
    """mean + std*noise, lane-dense (..., 128) view; inputs (B, H, W, C)."""
    B = mean.shape[0]
    n = mean.size // B
    shape = (B, n // 128, 128) if n % 128 == 0 else (B, 1, n)
    spec = pl.BlockSpec((1,) + shape[1:], lambda b: (b, 0, 0))
    out = pl.pallas_call(
        _fma_kernel,
        out_shape=jax.ShapeDtypeStruct(shape, jnp.float32),
        grid=(B,),
        in_specs=[spec, spec, spec],
        out_specs=spec,
        compiler_params=pltpu.CompilerParams(
            dimension_semantics=("parallel",), vmem_limit_bytes=VMEM_LIMIT),
    )(mean.reshape(shape), std_ext.reshape(shape), noise.reshape(shape))
    return out.reshape(mean.shape)


@jax.jit
def maxpool_3x3_s2(x):
    """3x3/2 max-pool, pad 1: parity-split input, window max in one kernel."""
    B, H, W, C = x.shape
    k, s, pad = 3, 2, 1
    Ho = (H + 2 * pad - k) // s + 1
    Wo = (W + 2 * pad - k) // s + 1
    Hp, Wp = H + 2 * pad, W + 2 * pad
    eh, ew = Hp % 2, Wp % 2
    xp = jnp.pad(x, ((0, 0), (pad, pad + eh), (pad, pad + ew), (0, 0)),
                 constant_values=-1e30)
    Hp, Wp = Hp + eh, Wp + ew
    Hp2, Wp2 = Hp // 2, Wp // 2
    parity = jnp.stack([xp[:, a::2, b::2, :] for a in (0, 1) for b in (0, 1)],
                       axis=1)                         # (B, 4, Hp2, Wp2, C)
    out = pl.pallas_call(
        functools.partial(_maxpool_parity_kernel, k=k, Ho=Ho, Wo=Wo),
        out_shape=jax.ShapeDtypeStruct((B, Ho, Wo, C), jnp.float32),
        grid=(B,),
        in_specs=[pl.BlockSpec((1, 4, Hp2, Wp2, C), lambda b: (b, 0, 0, 0, 0))],
        out_specs=pl.BlockSpec((1, Ho, Wo, C), lambda b: (b, 0, 0, 0)),
        compiler_params=pltpu.CompilerParams(
            dimension_semantics=("parallel",), vmem_limit_bytes=VMEM_LIMIT),
    )(parity)
    return out


# ------------------------------ parameters ----------------------------------

class _Rng:
    def __init__(self, seed=0):
        self._rs = np.random.RandomState(seed)

    def normal(self, shape, std):
        return jnp.asarray(self._rs.normal(0.0, std, size=shape).astype(np.float32))

    def conv(self, k, cin, cout):
        std = np.sqrt(2.0 / (k * k * cout))          # kaiming_normal, fan_out, relu
        return self.normal((k, k, cin, cout), std)

    def linear(self, din, dout):
        std = 1.0 / np.sqrt(din)
        return self.normal((din, dout), std), self.normal((dout,), std)

    def bias(self, n):
        return self.normal((n,), 0.01)


def _bn_scale(n):
    return jnp.full((n,), BN_SCALE, jnp.float32)


def _zeros(n):
    return jnp.zeros((n,), jnp.float32)


def make_se_block_params(rng, inplanes, planes, stride=1, with_variation=False):
    out_planes = planes + 1 if with_variation else planes
    red = out_planes // 16
    p = {
        "conv1": rng.conv(3, inplanes, planes),
        "conv2": rng.conv(3, planes, out_planes),
        "se_fc1_w": rng.conv(1, out_planes, red),
        "se_fc1_b": rng.bias(red),
        "se_fc2_w": rng.conv(1, red, out_planes),
        "se_fc2_b": rng.bias(out_planes),
        "stride": stride,
        "planes": planes,
        "out_planes": out_planes,
    }
    if stride != 1 or inplanes != out_planes:
        p["ds_conv"] = rng.conv(1, inplanes, out_planes)
    return p


def make_dcn_params(seed, num_class, num_support, num_query, num_embedding_class,
                    with_variation=True, weight_or_not="weight", loss="CE"):
    rng = _Rng(seed)
    # EmbeddingSENet(SEBasicBlock, [3, 4, 6, 3])
    emb = {"conv1": rng.conv(7, 3, 64)}
    layers = []
    inplanes = 64
    for planes, blocks, stride in [(64, 3, 1), (128, 4, 2), (256, 6, 2), (512, 3, 2)]:
        blks = [make_se_block_params(rng, inplanes, planes, stride, False)]
        inplanes = planes
        for _ in range(1, blocks - 1):
            blks.append(make_se_block_params(rng, inplanes, planes, 1, False))
        blks.append(make_se_block_params(rng, inplanes, planes, 1, with_variation))
        layers.append(blks)
    emb["layers"] = layers
    emb["fc_w"], emb["fc_b"] = rng.linear(512, num_embedding_class)

    # RelationSENet(SEBasicBlock, [2, 2, 2, 2])
    rel = {"relations": []}
    for inpl, planes, blocks, stride in [(128, 128, 2, 2), (384, 256, 2, 2),
                                         (768, 512, 2, 2), (1536, 512, 2, 1)]:
        blks = [make_se_block_params(rng, inpl, planes, stride, False)]
        ip = planes
        for _ in range(1, blocks):
            blks.append(make_se_block_params(rng, ip, planes, 1, False))
        rel["relations"].append(blks)
    rel["fc"] = [rng.linear(d, 1) for d in (128, 256, 512, 512)]
    rel["fc_w"] = [rng.linear(d, 1) for d in (128, 256, 512, 512)]

    return {"embedding": emb, "relation": rel,
            "num_class": num_class, "num_support": num_support,
            "num_query": num_query, "with_variation": with_variation,
            "weight_or_not": weight_or_not, "loss": loss}


# ------------------------------- model code ---------------------------------

def se_block_forward(bp, x):
    planes, out_planes, stride = bp["planes"], bp["out_planes"], bp["stride"]
    out = conv2d(x, bp["conv1"], _bn_scale(planes), _zeros(planes),
                 k=3, stride=stride, pad=1, act="relu")
    out = conv2d(out, bp["conv2"], _bn_scale(out_planes), _zeros(out_planes),
                 k=3, stride=1, pad=1, act="none")
    B, H, W, C = out.shape
    # downsample branch
    if "ds_conv" in bp:
        res = conv2d(x, bp["ds_conv"], _bn_scale(C), _zeros(C),
                     k=1, stride=stride, pad=0, act="none")
    else:
        res = x
    red = bp["se_fc1_w"].shape[-1]
    out = se_excite_residual_relu(out.reshape(B, H * W, C),
                                  res.reshape(B, H * W, C),
                                  bp["se_fc1_w"].reshape(C, red), bp["se_fc1_b"],
                                  bp["se_fc2_w"].reshape(red, C), bp["se_fc2_b"])
    return out.reshape(B, H, W, C)


def embedding_forward(ep, x, key, with_variation=True):
    out = conv2d(x, ep["conv1"], _bn_scale(64), _zeros(64),
                 k=7, stride=2, pad=3, act="relu")
    out = maxpool_3x3_s2(out)
    features, var_features, std_means = [], [], []
    for li, blks in enumerate(ep["layers"]):
        f = out
        for bp in blks:
            f = se_block_forward(bp, f)
        if with_variation:
            C = f.shape[-1]
            mean = f[..., :C - 1]
            std = jax.nn.sigmoid(f[..., C - 1:])                # (B, H, W, 1)
            std_ext = jnp.broadcast_to(std, mean.shape)
            B = mean.shape[0]
            noise = jax.random.normal(jax.random.fold_in(key, li), mean.shape,
                                      jnp.float32)
            f = add_scaled_noise(mean, jnp.asarray(std_ext), noise)
            var_features.extend([mean, std_ext])
            std_means.append(jnp.mean(std.reshape(B, -1), axis=1))
        features.append(f)
        out = f
    if with_variation:
        std_mean = (std_means[0] + std_means[1] + std_means[2] + std_means[3]) / 4.0
    else:
        std_mean = jnp.zeros((features[0].shape[0], 1), jnp.float32)
    pooled = global_mean(features[3])                           # avgpool(7) -> (B, 512)
    logits = dense(pooled, ep["fc_w"], jnp.ones((ep["fc_w"].shape[-1],)),
                   ep["fc_b"], act="none")
    return logits, features, std_mean, var_features


def relation_forward(rp, s_feats, q_feats, weight_or_not="weight", loss="CE"):
    def run(blks, x):
        for bp in blks:
            x = se_block_forward(bp, x)
        return x

    sim1 = run(rp["relations"][0], jnp.concatenate([s_feats[0], q_feats[0]], axis=-1))
    sim2 = run(rp["relations"][1], jnp.concatenate([s_feats[1], sim1, q_feats[1]], axis=-1))
    sim3 = run(rp["relations"][2], jnp.concatenate([s_feats[2], sim2, q_feats[2]], axis=-1))
    sim4 = run(rp["relations"][3], jnp.concatenate([s_feats[3], sim3, q_feats[3]], axis=-1))

    scores = []
    for sim, (fw, fb), (ww, wb) in zip([sim1, sim2, sim3, sim4], rp["fc"], rp["fc_w"]):
        pooled = global_mean(sim)
        score = dense(pooled, fw, jnp.ones((1,)), fb, act="none")
        w = dense(pooled, ww, jnp.ones((1,)), wb, act="sigmoid")
        if loss == "BCE":
            score = jax.nn.sigmoid(score)
        if weight_or_not == "weight":
            score = w * score
        scores.append(score)
    return tuple(scores)


def dcn_forward(params, support_x_nchw, query_x_nchw, key):
    nc, ns, nq = params["num_class"], params["num_support"], params["num_query"]
    wv = params["with_variation"]
    ep, rp = params["embedding"], params["relation"]
    sx = jnp.transpose(support_x_nchw, (0, 2, 3, 1)).astype(jnp.float32)  # NCHW -> NHWC
    qx = jnp.transpose(query_x_nchw, (0, 2, 3, 1)).astype(jnp.float32)
    k_s, k_q = jax.random.split(key)

    if ns > 1 and not wv:
        _, pre_feats, _, _ = embedding_forward(ep, sx, k_s, wv)
        s_feats = []
        for f in pre_feats:
            b, h, w, c = f.shape
            f = f.reshape(nc, ns, h, w, c).mean(axis=1)
            s_feats.append(jnp.tile(f[None], (nc * nq, 1, 1, 1, 1)).reshape(-1, h, w, c))
    elif ns > 1 and wv:
        _, _, _, var_feats = embedding_forward(ep, sx, k_s, wv)
        pro = []
        for f in var_feats:
            b, h, w, c = f.shape
            f = f.reshape(nc, ns, h, w, c).mean(axis=1)
            pro.append(jnp.tile(f[None], (nc * nq, 1, 1, 1, 1)).reshape(-1, h, w, c))
        s_feats = []
        for i in range(4):
            noise = jax.random.normal(jax.random.fold_in(k_s, 100 + i),
                                      pro[2 * i].shape, jnp.float32)
            s_feats.append(pro[2 * i] + pro[2 * i + 1] * noise)
    else:
        sx_ext = jnp.tile(sx[None], (nc * nq, 1, 1, 1, 1)).reshape(-1, 224, 224, 3)
        _, s_feats, _, _ = embedding_forward(ep, sx_ext, k_s, wv)

    qx_ext = jnp.tile(qx[None], (nc, 1, 1, 1, 1))
    qx_ext = jnp.transpose(qx_ext, (1, 0, 2, 3, 4)).reshape(-1, 224, 224, 3)
    _, q_feats, _, _ = embedding_forward(ep, qx_ext, k_q, wv)

    return relation_forward(rp, s_feats, q_feats,
                            params["weight_or_not"], params["loss"])


# ---------------------------------- main -------------------------------------

if __name__ == "__main__":
    num_class, num_support, num_query, num_embedding_class = 2, 1, 1, 5
    params = make_dcn_params(seed=0, num_class=num_class, num_support=num_support,
                             num_query=num_query,
                             num_embedding_class=num_embedding_class,
                             with_variation=True, weight_or_not="weight", loss="CE")

    key = jax.random.PRNGKey(0)
    k_s, k_q, k_noise = jax.random.split(key, 3)
    support_x = jax.random.normal(k_s, (num_class * num_support, 3, 224, 224), jnp.float32)
    query_x = jax.random.normal(k_q, (num_class * num_query, 3, 224, 224), jnp.float32)

    score1, score2, score3, score4 = dcn_forward(params, support_x, query_x, k_noise)
    scores = [jax.block_until_ready(s) for s in (score1, score2, score3, score4)]

    expected_rows = num_class * num_query * num_class * num_support
    assert all(s.shape == (expected_rows, 1) for s in scores), [s.shape for s in scores]
    assert all(bool(jnp.all(jnp.isfinite(s))) for s in scores)
    print("KERNEL_OK")
</pallas_src>

<mosaic_0001>
module attributes {stable_mosaic.version = 11 : i64} {
  func.func @_matmul_affine_single_kernel(%arg0: i32, %arg1: i32, %arg2: memref<1024x147xbf16, #tpu.memory_space<vmem>>, %arg3: memref<147x64xbf16, #tpu.memory_space<vmem>>, %arg4: memref<1x64xf32, #tpu.memory_space<vmem>>, %arg5: memref<1x64xf32, #tpu.memory_space<vmem>>, %arg6: memref<1024x64xf32, #tpu.memory_space<vmem>>) attributes {dimension_semantics = [#tpu.dimension_semantics<parallel>, #tpu.dimension_semantics<parallel>], iteration_bounds = array<i64: 49, 1>, scalar_prefetch = 0 : i64, scratch_operands = 0 : i64, tpu.core_type = #tpu.core_type<tc>, window_params = [{transform_indices = @transform_0, window_bounds = array<i64: 1024, 147>}, {transform_indices = @transform_1, window_bounds = array<i64: 147, 64>}, {transform_indices = @transform_2, window_bounds = array<i64: 1, 64>}, {transform_indices = @transform_3, window_bounds = array<i64: 1, 64>}, {transform_indices = @transform_4, window_bounds = array<i64: 1024, 64>}]} {
    %c0 = arith.constant 0 : index
    %c0_0 = arith.constant 0 : index
    %0 = vector.load %arg2[%c0, %c0_0] : memref<1024x147xbf16, #tpu.memory_space<vmem>>, vector<1024x147xbf16>
    %c0_1 = arith.constant 0 : index
    %c0_2 = arith.constant 0 : index
    %1 = vector.load %arg3[%c0_1, %c0_2] : memref<147x64xbf16, #tpu.memory_space<vmem>>, vector<147x64xbf16>
    %cst = arith.constant dense<0.000000e+00> : vector<1024x64xf32>
    %2 = tpu.matmul %0, %1, %cst {dimension_numbers = #tpu.dot_dimension_numbers<[1], [0], [0], [1], [0, 0, 1, 1], [], []>} : vector<1024x147xbf16>, vector<147x64xbf16>, vector<1024x64xf32> -> vector<1024x64xf32>
    %c0_3 = arith.constant 0 : index
    %c0_4 = arith.constant 0 : index
    %3 = vector.load %arg4[%c0_3, %c0_4] : memref<1x64xf32, #tpu.memory_space<vmem>>, vector<1x64xf32>
    %4 = vector.broadcast %3 : vector<1x64xf32> to vector<1024x64xf32>
    %5 = arith.mulf %2, %4 : vector<1024x64xf32>
    %c0_5 = arith.constant 0 : index
    %c0_6 = arith.constant 0 : index
    %6 = vector.load %arg5[%c0_5, %c0_6] : memref<1x64xf32, #tpu.memory_space<vmem>>, vector<1x64xf32>
    %7 = vector.broadcast %6 : vector<1x64xf32> to vector<1024x64xf32>
    %8 = arith.addf %5, %7 : vector<1024x64xf32>
    %cst_7 = arith.constant 0.000000e+00 : f32
    %9 = vector.broadcast %cst_7 : f32 to vector<1024x64xf32>
    %10 = arith.maximumf %8, %9 : vector<1024x64xf32>
    %c0_8 = arith.constant 0 : index
    %c0_9 = arith.constant 0 : index
    %11 = vector.load %arg6[%c0_8, %c0_9] : memref<1024x64xf32, #tpu.memory_space<vmem>>, vector<1024x64xf32>
    tpu.vector_store %arg6[%c0_8, %c0_9], %10 {strides = array<i32>} : memref<1024x64xf32, #tpu.memory_space<vmem>>, vector<1024x64xf32>,
    return
  }
  func.func @transform_0(%arg0: i32, %arg1: i32) -> (i32, i32) {
    %c0_i32 = arith.constant 0 : i32
    %c0_i32_0 = arith.constant 0 : i32
    return %arg0, %c0_i32 : i32, i32
  }
  func.func @transform_1(%arg0: i32, %arg1: i32) -> (i32, i32) {
    %c0_i32 = arith.constant 0 : i32
    %c0_i32_0 = arith.constant 0 : i32
    return %c0_i32, %arg1 : i32, i32
  }
  func.func @transform_2(%arg0: i32, %arg1: i32) -> (i32, i32) {
    %c0_i32 = arith.constant 0 : i32
    %c0_i32_0 = arith.constant 0 : i32
    return %c0_i32, %arg1 : i32, i32
  }
  func.func @transform_3(%arg0: i32, %arg1: i32) -> (i32, i32) {
    %c0_i32 = arith.constant 0 : i32
    %c0_i32_0 = arith.constant 0 : i32
    return %c0_i32, %arg1 : i32, i32
  }
  func.func @transform_4(%arg0: i32, %arg1: i32) -> (i32, i32) {
    %c0_i32 = arith.constant 0 : i32
    return %arg0, %arg1 : i32, i32
  }
}

</mosaic_0001>

<llo_original>
// kernel: conv2d.1
$region0: #{conv2d.1}
  #allocation0 [shape = 'u32[]', space=smem, size = 0x4, offset = 0x4, fixed_abs, tag = 'smem constant byte address 0x4 - core index']
  #allocation1 [shape = 'u32[72,128]{1,0:T(1,128)}', space=vmem, size = 0x9000, scoped, tag = 'internal scratch']
  %s0 = inlined_call_operand.vmem [shape: bf16[50176,147], index: 0, kind: input, shape index: {}]
  %s1 = inlined_call_operand.vmem [shape: bf16[147,64], index: 1, kind: input, shape index: {}]
  %s2 = inlined_call_operand.vmem [shape: f32[1,64], index: 2, kind: input, shape index: {}]
  %s3 = inlined_call_operand.vmem [shape: f32[1,64], index: 3, kind: input, shape index: {}]
  %s4 = inlined_call_operand.vmem [shape: f32[50176,64], index: 4, kind: output, shape index: {}]
  %s5 = sld [smem:[#allocation0]]
  $region49: #{conv2d.1} parent=0
    _
  %s7 = ssub.s32 1, %s5
  %s8 = scalar_select 0, %s7, %s5
  loop: start=0, step=1, limit=51
  $region2: #{conv2d.1} parent=0 // loop_pre_header
    _
  $region3: #{conv2d.1} parent=0 // loop_header
    %s10 = sphi 0, %s14
    %p11 = scmp.ge.s32.totalorder %s10, 51
    %s17 = sphi 0, %s29
    %s18 = sphi 0, %s25
    %s19 = sphi 0, %s17
    %s20 = sphi 0, %s18
    %s21 = sphi 0, %s19
    %s22 = sphi 0, %s20
    %s32 = sphi 0, %s34
    %s35 = sphi 0, %s32
    %s36 = sphi 0, %s35
    %s52 = sphi 0, %s36
    %s58 = sphi 0, %s60
    %s61 = sphi 0, %s58
    %s62 = sphi 0, %s61
    %s78 = sphi 0, %s62
    %s84 = sphi 0, %s86
    %s87 = sphi 0, %s84
    %s88 = sphi 0, %s87
    %s104 = sphi 0, %s88
    %s110 = sphi 0, %s112
    %s113 = sphi 0, %s110
    %s114 = sphi 0, %s113
    %s130 = sphi 0, %s114
    %s138 = sphi 0, %s140
    %s141 = sphi 0, %s138
    %s142 = sphi 0, %s141
    %s158 = sphi 0, %s142
  $region4: #{conv2d.1} parent=0 // loop_header_branch
    %13 = sbr.rel (%p11) target = $region8
  $region5: #{conv2d.1} parent=0 // loop_body
    %s15 = ssub.s32 %s10, 1
    %s16 = ssub.s32 %s10, 2
    %s23 = sadd.s32 1, %s18
    %p24 = scmp.ge.s32.totalorder %s23, 1
    %s25 = scalar_select %p24, 0, %s23
    %s26 = sadd.s32 1, %s17
    %s27 = scalar_select %p24, %s26, %s17
    %p28 = scmp.ge.s32.totalorder %s27, 49
    %s29 = scalar_select %p28, 0, %s27
    %s30 = ssub.s32 %s17, %s29
    %p31 = scmp.eq.s32.totalorder %s30, 0
    %s33 = sadd.s32 %s32, 1
    %s34 = scalar_select %p31, %s32, %s33
    %p37 = pneg %p31
    %p38 = scmp.eq.s32.totalorder %s10, 48
    %p39 = por %p37, %p38
    %p40 = scmp.ne.s32.totalorder %s32, %s35
    %p41 = scmp.eq.s32.totalorder %s10, 0
    %p42 = por %p40, %p41
    %p43 = scmp.ne.s32.totalorder %s32, %s35
    %p44 = scmp.eq.s32.totalorder %s15, 48
    %p45 = por %p43, %p44
    %p46 = scmp.ne.s32.totalorder %s35, %s36
    %p47 = scmp.eq.s32.totalorder %s15, 0
    %p48 = por %p46, %p47
    %p49 = scmp.ne.s32.totalorder %s35, %s36
    %p50 = scmp.eq.s32.totalorder %s16, 48
    %p51 = por %p49, %p50
    %p53 = scmp.ne.s32.totalorder %s36, %s52
    %p54 = scmp.eq.s32.totalorder %s16, 0
    %p55 = por %p53, %p54
    %s56 = ssub.s32 %s18, %s25
    %p57 = scmp.eq.s32.totalorder %s56, 0
    %s59 = sadd.s32 %s58, 1
    %s60 = scalar_select %p57, %s58, %s59
    %p63 = pneg %p57
    %p64 = scmp.eq.s32.totalorder %s10, 48
    %p65 = por %p63, %p64
    %p66 = scmp.ne.s32.totalorder %s58, %s61
    %p67 = scmp.eq.s32.totalorder %s10, 0
    %p68 = por %p66, %p67
    %p69 = scmp.ne.s32.totalorder %s58, %s61
    %p70 = scmp.eq.s32.totalorder %s15, 48
    %p71 = por %p69, %p70
    %p72 = scmp.ne.s32.totalorder %s61, %s62
    %p73 = scmp.eq.s32.totalorder %s15, 0
    %p74 = por %p72, %p73
    %p75 = scmp.ne.s32.totalorder %s61, %s62
    %p76 = scmp.eq.s32.totalorder %s16, 48
    %p77 = por %p75, %p76
    %p79 = scmp.ne.s32.totalorder %s62, %s78
    %p80 = scmp.eq.s32.totalorder %s16, 0
    %p81 = por %p79, %p80
    %s82 = ssub.s32 %s18, %s25
    %p83 = scmp.eq.s32.totalorder %s82, 0
    %s85 = sadd.s32 %s84, 1
    %s86 = scalar_select %p83, %s84, %s85
    %p89 = pneg %p83
    %p90 = scmp.eq.s32.totalorder %s10, 48
    %p91 = por %p89, %p90
    %p92 = scmp.ne.s32.totalorder %s84, %s87
    %p93 = scmp.eq.s32.totalorder %s10, 0
    %p94 = por %p92, %p93
    %p95 = scmp.ne.s32.totalorder %s84, %s87
    %p96 = scmp.eq.s32.totalorder %s15, 48
    %p97 = por %p95, %p96
    %p98 = scmp.ne.s32.totalorder %s87, %s88
    %p99 = scmp.eq.s32.totalorder %s15, 0
    %p100 = por %p98, %p99
    %p101 = scmp.ne.s32.totalorder %s87, %s88
    %p102 = scmp.eq.s32.totalorder %s16, 48
    %p103 = por %p101, %p102
    %p105 = scmp.ne.s32.totalorder %s88, %s104
    %p106 = scmp.eq.s32.totalorder %s16, 0
    %p107 = por %p105, %p106
    %s108 = ssub.s32 %s18, %s25
    %p109 = scmp.eq.s32.totalorder %s108, 0
    %s111 = sadd.s32 %s110, 1
    %s112 = scalar_select %p109, %s110, %s111
    %p115 = pneg %p109
    %p116 = scmp.eq.s32.totalorder %s10, 48
    %p117 = por %p115, %p116
    %p118 = scmp.ne.s32.totalorder %s110, %s113
    %p119 = scmp.eq.s32.totalorder %s10, 0
    %p120 = por %p118, %p119
    %p121 = scmp.ne.s32.totalorder %s110, %s113
    %p122 = scmp.eq.s32.totalorder %s15, 48
    %p123 = por %p121, %p122
    %p124 = scmp.ne.s32.totalorder %s113, %s114
    %p125 = scmp.eq.s32.totalorder %s15, 0
    %p126 = por %p124, %p125
    %p127 = scmp.ne.s32.totalorder %s113, %s114
    %p128 = scmp.eq.s32.totalorder %s16, 48
    %p129 = por %p127, %p128
    %p131 = scmp.ne.s32.totalorder %s114, %s130
    %p132 = scmp.eq.s32.totalorder %s16, 0
    %p133 = por %p131, %p132
    %s134 = ssub.s32 %s17, %s29
    %s135 = ssub.s32 %s18, %s25
    %s136 = sor.u32 %s134, %s135
    %p137 = scmp.eq.s32.totalorder %s136, 0
    %s139 = sadd.s32 %s138, 1
    %s140 = scalar_select %p137, %s138, %s139
    %p143 = pneg %p137
    %p144 = scmp.eq.s32.totalorder %s10, 48
    %p145 = por %p143, %p144
    %p146 = scmp.ne.s32.totalorder %s138, %s141
    %p147 = scmp.eq.s32.totalorder %s10, 0
    %p148 = por %p146, %p147
    %p149 = scmp.ne.s32.totalorder %s138, %s141
    %p150 = scmp.eq.s32.totalorder %s15, 48
    %p151 = por %p149, %p150
    %p152 = scmp.ne.s32.totalorder %s141, %s142
    %p153 = scmp.eq.s32.totalorder %s15, 0
    %p154 = por %p152, %p153
    %p155 = scmp.ne.s32.totalorder %s141, %s142
    %p156 = scmp.eq.s32.totalorder %s16, 48
    %p157 = por %p155, %p156
    %p159 = scmp.ne.s32.totalorder %s142, %s158
    %p160 = scmp.eq.s32.totalorder %s16, 0
    %p161 = por %p159, %p160
    %p162 = scmp.le.s32.totalorder 1, %s10
    %p163 = scmp.lt.s32.totalorder %s10, 50
    %p164 = pnand %p162, %p163
    %p165 = pneg %p164
    // Predicated region
    $region9: #{conv2d.1} parent=5 // pred_check
      _
    $region10: #{conv2d.1} parent=5 // pred_check_branch
      %167 = sbr.rel (%p164) target = $region12
    $region11: #{conv2d.1} parent=5 // pred_region
      %s168 = ssub.s32 %s10, 1
      // Predicated region
      $region13: #{conv2d.1} parent=11 // pred_check
        %p169 = pneg %p74
      $region14: #{conv2d.1} parent=11 // pred_check_branch
        %171 = sbr.rel (%p169) target = $region16
      $region15: #{conv2d.1} parent=11 // pred_region
        %p172 = scmp.lt.s32.totalorder %s20, 0
        %s173 = scalar_select %p172, %s20, 0
        %s174 = smul.addr %s173, 4
        %s175 = scalar_lea.vmem %s1, %s174
      $region16: #{conv2d.1} parent=11 // pred_fallthru
        _
      // Predicated region
      $region17: #{conv2d.1} parent=11 // pred_check
        %p176 = pneg %p100
      $region18: #{conv2d.1} parent=11 // pred_check_branch
        %178 = sbr.rel (%p176) target = $region20
      $region19: #{conv2d.1} parent=11 // pred_region
        %p179 = scmp.lt.s32.totalorder %s20, 0
        %s180 = scalar_select %p179, %s20, 0
        %s181 = scalar_lea.vmem %s2, %s180
      $region20: #{conv2d.1} parent=11 // pred_fallthru
        _
      // Predicated region
      $region21: #{conv2d.1} parent=11 // pred_check
        %p182 = pneg %p126
      $region22: #{conv2d.1} parent=11 // pred_check_branch
        %184 = sbr.rel (%p182) target = $region24
      $region23: #{conv2d.1} parent=11 // pred_region
        %p185 = scmp.lt.s32.totalorder %s20, 0
        %s186 = scalar_select %p185, %s20, 0
        %s187 = scalar_lea.vmem %s3, %s186
      $region24: #{conv2d.1} parent=11 // pred_fallthru
        _
    $region12: #{conv2d.1} parent=5 // pred_fallthru
      _
    %p188 = scmp.lt.s32.totalorder %s10, 49
    // Predicated region
    $region25: #{conv2d.1} parent=5 // pred_check
      %p189 = pneg %p188
    $region26: #{conv2d.1} parent=5 // pred_check_branch
      %191 = sbr.rel (%p189) target = $region28
    $region27: #{conv2d.1} parent=5 // pred_region
      // Predicated region
      $region29: #{conv2d.1} parent=27 // pred_check
        %p192 = pneg %p42
      $region30: #{conv2d.1} parent=27 // pred_check_branch
        %194 = sbr.rel (%p192) target = $region32
      $region31: #{conv2d.1} parent=27 // pred_region
        %s195 = smul.u32 128, %s17
        %p196 = scmp.lt.s32.totalorder %s195, 6271
        %s197 = scalar_select %p196, %s195, 6271
        %s198 = smul.addr %s197, 2
        %s199 = smul.addr %s198, 4
        %s200 = scalar_lea.vmem %s0, %s199
        %s201 = smul.u32 128, %s17
      $region32: #{conv2d.1} parent=27 // pred_fallthru
        _
    $region28: #{conv2d.1} parent=5 // pred_fallthru
      _
    %p202 = scmp.le.s32.totalorder 1, %s10
    %p203 = scmp.lt.s32.totalorder %s10, 50
    %p204 = pnand %p202, %p203
    %p205 = pneg %p204
    // Predicated region
    $region33: #{conv2d.1} parent=5 // pred_check
      _
    $region34: #{conv2d.1} parent=5 // pred_check_branch
      %207 = sbr.rel (%p204) target = $region36
    $region35: #{conv2d.1} parent=5 // pred_region
      %s208 = ssub.s32 %s10, 1
      %s209 = smul.u32 128, %s19
      %p210 = scmp.lt.s32.totalorder %s209, 6271
      %s211 = scalar_select %p210, %s209, 6271
      %s212 = smul.addr %s211, 2
      %s213 = smul.addr %s212, 4
      %s214 = scalar_lea.vmem %s0, %s213
      %p215 = pneg %p48
      %p216 = pneg %p45
      %p217 = scmp.lt.s32.totalorder %s20, 0
      %s218 = scalar_select %p217, %s20, 0
      %s219 = smul.addr %s218, 4
      %s220 = scalar_lea.vmem %s1, %s219
      %p221 = pneg %p74
      %p222 = pneg %p71
      %p223 = scmp.lt.s32.totalorder %s20, 0
      %s224 = scalar_select %p223, %s20, 0
      %s225 = scalar_lea.vmem %s2, %s224
      %p226 = pneg %p100
      %p227 = pneg %p97
      %p228 = scmp.lt.s32.totalorder %s20, 0
      %s229 = scalar_select %p228, %s20, 0
      %s230 = scalar_lea.vmem %s3, %s229
      %p231 = pneg %p126
      %p232 = pneg %p123
      %p233 = pneg %p154
      %p234 = pneg %p151
      %s235 = smul.u32 128, %s19
      %p236 = scmp.lt.s32.totalorder %s235, 6271
      %s237 = scalar_select %p236, %s235, 6271
      %p238 = scmp.lt.s32.totalorder %s20, 0
      %s239 = scalar_select %p238, %s20, 0
      %s240 = sadd.s32 %s239, %s237
      %s241 = smul.addr %s240, 8
      %s242 = scalar_lea.vmem %s4, %s241
      %s243 = smul.u32 128, %s19
      %p244 = scmp.lt.s32.totalorder %s243, 6271
      %s245 = scalar_select %p244, %s243, 6271
      %s246 = smul.addr %s245, 2
      %s247 = smul.addr %s246, 4
      %s248 = scalar_lea.vmem %s0, %s247
      %s249 = smul.u32 128, %s19
      %p250 = scmp.lt.s32.totalorder %s20, 0
      %s251 = scalar_select %p250, %s20, 0
      %s252 = smul.addr %s251, 4
      %s253 = scalar_lea.vmem %s1, %s252
      %p254 = scmp.lt.s32.totalorder %s20, 0
      %s255 = scalar_select %p254, %s20, 0
      %s256 = scalar_lea.vmem %s2, %s255
      %p257 = scmp.lt.s32.totalorder %s20, 0
      %s258 = scalar_select %p257, %s20, 0
      %s259 = scalar_lea.vmem %s3, %s258
      %s260 = smul.u32 128, %s19
      %p261 = scmp.lt.s32.totalorder %s260, 6271
      %s262 = scalar_select %p261, %s260, 6271
      %p263 = scmp.lt.s32.totalorder %s20, 0
      %s264 = scalar_select %p263, %s20, 0
      %s265 = sadd.s32 %s264, %s262
      %s266 = smul.addr %s265, 8
      %s267 = scalar_lea.vmem %s4, %s266
      %s268 = smul.u32 128, %s19
      %v270 = vld [vmem:[%s248] sm:$0xff]
      %v271 = vld [vmem:[%s248 + $0x8] sm:$0xff]
      %v272 = vld [vmem:[%s248 + $0x10] sm:$0xff]
      %v273 = vld [vmem:[%s248 + $0x18] sm:$0xff]
      %v274 = vld [vmem:[%s248 + $0x20] sm:$0xff]
      %v275 = vld [vmem:[%s248 + $0x28] sm:$0xff]
      %v276 = vld [vmem:[%s248 + $0x30] sm:$0xff]
      %v277 = vld [vmem:[%s248 + $0x38] sm:$0xff]
      %v278 = vld [vmem:[%s248 + $0x40] sm:$0xff]
      %v279 = vld [vmem:[%s248 + $0x48] sm:$0xff]
      %v280 = vld [vmem:[%s248 + $0x50] sm:$0xff]
      %v281 = vld [vmem:[%s248 + $0x58] sm:$0xff]
      %v282 = vld [vmem:[%s248 + $0x60] sm:$0xff]
      %v283 = vld [vmem:[%s248 + $0x68] sm:$0xff]
      %v284 = vld [vmem:[%s248 + $0x70] sm:$0xff]
      %v285 = vld [vmem:[%s248 + $0x78] sm:$0xff]
      %v286 = vld [vmem:[%s248 + $0x80] sm:$0xff]
      %v287 = vld [vmem:[%s248 + $0x88] sm:$0xff]
      %v288 = vld [vmem:[%s248 + $0x90] sm:$0xff]
      %v289 = vld [vmem:[%s248 + $0x98] sm:$0xff]
      %v290 = vld [vmem:[%s248 + $0xa0] sm:$0xff]
      %v291 = vld [vmem:[%s248 + $0xa8] sm:$0xff]
      %v292 = vld [vmem:[%s248 + $0xb0] sm:$0xff]
      %v293 = vld [vmem:[%s248 + $0xb8] sm:$0xff]
      %v294 = vld [vmem:[%s248 + $0xc0] sm:$0xff]
      %v295 = vld [vmem:[%s248 + $0xc8] sm:$0xff]
      %v296 = vld [vmem:[%s248 + $0xd0] sm:$0xff]
      %v297 = vld [vmem:[%s248 + $0xd8] sm:$0xff]
      %v298 = vld [vmem:[%s248 + $0xe0] sm:$0xff]
      %v299 = vld [vmem:[%s248 + $0xe8] sm:$0xff]
      %v300 = vld [vmem:[%s248 + $0xf0] sm:$0xff]
      %v301 = vld [vmem:[%s248 + $0xf8] sm:$0xff]
      %v302 = vld [vmem:[%s248 + $0x100] sm:$0xff]
      %v303 = vld [vmem:[%s248 + $0x108] sm:$0xff]
      %v304 = vld [vmem:[%s248 + $0x110] sm:$0xff]
      %v305 = vld [vmem:[%s248 + $0x118] sm:$0xff]
      %v306 = vld [vmem:[%s248 + $0x120] sm:$0xff]
      %v307 = vld [vmem:[%s248 + $0x128] sm:$0xff]
      %v308 = vld [vmem:[%s248 + $0x130] sm:$0xff]
      %v309 = vld [vmem:[%s248 + $0x138] sm:$0xff]
      %v310 = vld [vmem:[%s248 + $0x140] sm:$0xff]
      %v311 = vld [vmem:[%s248 + $0x148] sm:$0xff]
      %v312 = vld [vmem:[%s248 + $0x150] sm:$0xff]
      %v313 = vld [vmem:[%s248 + $0x158] sm:$0xff]
      %v314 = vld [vmem:[%s248 + $0x160] sm:$0xff]
      %v315 = vld [vmem:[%s248 + $0x168] sm:$0xff]
      %v316 = vld [vmem:[%s248 + $0x170] sm:$0xff]
      %v317 = vld [vmem:[%s248 + $0x178] sm:$0xff]
      %v318 = vld [vmem:[%s248 + $0x180] sm:$0xff]
      %v319 = vld [vmem:[%s248 + $0x188] sm:$0xff]
      %v320 = vld [vmem:[%s248 + $0x190] sm:$0xff]
      %v321 = vld [vmem:[%s248 + $0x198] sm:$0xff]
      %v322 = vld [vmem:[%s248 + $0x1a0] sm:$0xff]
      %v323 = vld [vmem:[%s248 + $0x1a8] sm:$0xff]
      %v324 = vld [vmem:[%s248 + $0x1b0] sm:$0xff]
      %v325 = vld [vmem:[%s248 + $0x1b8] sm:$0xff]
      %v326 = vld [vmem:[%s248 + $0x1c0] sm:$0xff]
      %v327 = vld [vmem:[%s248 + $0x1c8] sm:$0xff]
      %v328 = vld [vmem:[%s248 + $0x1d0] sm:$0xff]
      %v329 = vld [vmem:[%s248 + $0x1d8] sm:$0xff]
      %v330 = vld [vmem:[%s248 + $0x1e0] sm:$0xff]
      %v331 = vld [vmem:[%s248 + $0x1e8] sm:$0xff]
      %v332 = vld [vmem:[%s248 + $0x1f0] sm:$0xff]
      %v333 = vld [vmem:[%s248 + $0x1f8] sm:$0xff]
      %v334 = vld [vmem:[%s248 + $0x200] sm:$0xff]
      %v335 = vld [vmem:[%s248 + $0x208] sm:$0xff]
      %v336 = vld [vmem:[%s248 + $0x210] sm:$0xff]
      %v337 = vld [vmem:[%s248 + $0x218] sm:$0xff]
      %v338 = vld [vmem:[%s248 + $0x220] sm:$0xff]
      %v339 = vld [vmem:[%s248 + $0x228] sm:$0xff]
      %v340 = vld [vmem:[%s248 + $0x230] sm:$0xff]
      %v341 = vld [vmem:[%s248 + $0x238] sm:$0xff]
      %v342 = vld [vmem:[%s248 + $0x240] sm:$0xff]
      %v343 = vld [vmem:[%s248 + $0x248] sm:$0xff]
      %v344 = vld [vmem:[%s248 + $0x250] sm:$0xff]
      %v345 = vld [vmem:[%s248 + $0x258] sm:$0xff]
      %v346 = vld [vmem:[%s248 + $0x260] sm:$0xff]
      %v347 = vld [vmem:[%s248 + $0x268] sm:$0xff]
      %v348 = vld [vmem:[%s248 + $0x270] sm:$0xff]
      %v349 = vld [vmem:[%s248 + $0x278] sm:$0xff]
      %v350 = vld [vmem:[%s248 + $0x280] sm:$0xff]
      %v351 = vld [vmem:[%s248 + $0x288] sm:$0xff]
      %v352 = vld [vmem:[%s248 + $0x290] sm:$0xff]
      %v353 = vld [vmem:[%s248 + $0x298] sm:$0xff]
      %v354 = vld [vmem:[%s248 + $0x2a0] sm:$0xff]
      %v355 = vld [vmem:[%s248 + $0x2a8] sm:$0xff]
      %v356 = vld [vmem:[%s248 + $0x2b0] sm:$0xff]
      %v357 = vld [vmem:[%s248 + $0x2b8] sm:$0xff]
      %v358 = vld [vmem:[%s248 + $0x2c0] sm:$0xff]
      %v359 = vld [vmem:[%s248 + $0x2c8] sm:$0xff]
      %v360 = vld [vmem:[%s248 + $0x2d0] sm:$0xff]
      %v361 = vld [vmem:[%s248 + $0x2d8] sm:$0xff]
      %v362 = vld [vmem:[%s248 + $0x2e0] sm:$0xff]
      %v363 = vld [vmem:[%s248 + $0x2e8] sm:$0xff]
      %v364 = vld [vmem:[%s248 + $0x2f0] sm:$0xff]
      %v365 = vld [vmem:[%s248 + $0x2f8] sm:$0xff]
      %v366 = vld [vmem:[%s248 + $0x300] sm:$0xff]
      %v367 = vld [vmem:[%s248 + $0x308] sm:$0xff]
      %v368 = vld [vmem:[%s248 + $0x310] sm:$0xff]
      %v369 = vld [vmem:[%s248 + $0x318] sm:$0xff]
      %v370 = vld [vmem:[%s248 + $0x320] sm:$0xff]
      %v371 = vld [vmem:[%s248 + $0x328] sm:$0xff]
      %v372 = vld [vmem:[%s248 + $0x330] sm:$0xff]
      %v373 = vld [vmem:[%s248 + $0x338] sm:$0xff]
      %v374 = vld [vmem:[%s248 + $0x340] sm:$0xff]
      %v375 = vld [vmem:[%s248 + $0x348] sm:$0xff]
      %v376 = vld [vmem:[%s248 + $0x350] sm:$0xff]
      %v377 = vld [vmem:[%s248 + $0x358] sm:$0xff]
      %v378 = vld [vmem:[%s248 + $0x360] sm:$0xff]
      %v379 = vld [vmem:[%s248 + $0x368] sm:$0xff]
      %v380 = vld [vmem:[%s248 + $0x370] sm:$0xff]
      %v381 = vld [vmem:[%s248 + $0x378] sm:$0xff]
      %v382 = vld [vmem:[%s248 + $0x380] sm:$0xff]
      %v383 = vld [vmem:[%s248 + $0x388] sm:$0xff]
      %v384 = vld [vmem:[%s248 + $0x390] sm:$0xff]
      %v385 = vld [vmem:[%s248 + $0x398] sm:$0xff]
      %v386 = vld [vmem:[%s248 + $0x3a0] sm:$0xff]
      %v387 = vld [vmem:[%s248 + $0x3a8] sm:$0xff]
      %v388 = vld [vmem:[%s248 + $0x3b0] sm:$0xff]
      %v389 = vld [vmem:[%s248 + $0x3b8] sm:$0xff]
      %v390 = vld [vmem:[%s248 + $0x3c0] sm:$0xff]
      %v391 = vld [vmem:[%s248 + $0x3c8] sm:$0xff]
      %v392 = vld [vmem:[%s248 + $0x3d0] sm:$0xff]
      %v393 = vld [vmem:[%s248 + $0x3d8] sm:$0xff]
      %v394 = vld [vmem:[%s248 + $0x3e0] sm:$0xff]
      %v395 = vld [vmem:[%s248 + $0x3e8] sm:$0xff]
      %v396 = vld [vmem:[%s248 + $0x3f0] sm:$0xff]
      %v397 = vld [vmem:[%s248 + $0x3f8] sm:$0xff]
      %v398 = vld [vmem:[%s253] sm:$0xf]
      %v399 = vld [vmem:[%s253 + $0x4] sm:$0xf]
      %v400 = vld [vmem:[%s253 + $0x8] sm:$0xf]
      %v401 = vld [vmem:[%s253 + $0xc] sm:$0xf]
      %v402 = vld [vmem:[%s253 + $0x10] sm:$0xf]
      %v403 = vld [vmem:[%s253 + $0x14] sm:$0xf]
      %v404 = vld [vmem:[%s253 + $0x18] sm:$0xf]
      %v405 = vld [vmem:[%s253 + $0x1c] sm:$0xf]
      %v406 = vld [vmem:[%s253 + $0x20] sm:$0xf]
      %v407 = vld [vmem:[%s253 + $0x24] sm:$0xf]
      %v408 = vld [vmem:[%s253 + $0x28] sm:$0xf]
      %v409 = vld [vmem:[%s253 + $0x2c] sm:$0xf]
      %v410 = vld [vmem:[%s253 + $0x30] sm:$0xf]
      %v411 = vld [vmem:[%s253 + $0x34] sm:$0xf]
      %v412 = vld [vmem:[%s253 + $0x38] sm:$0xf]
      %v413 = vld [vmem:[%s253 + $0x3c] sm:$0xf]
      %v414 = vld [vmem:[%s253 + $0x40] sm:$0xf]
      %v415 = vld [vmem:[%s253 + $0x44] sm:$0xf]
      %v416 = vld [vmem:[%s253 + $0x48] sm:$0x3]
      %v545 = vunpack.c.l.b16 %v270
      %v546 = vunpack.c.h.b16 %v270
      %v547 = vunpack.c.l.b16 %v271
      %v548 = vunpack.c.h.b16 %v271
      %v549 = vunpack.c.l.b16 %v272
      %v550 = vunpack.c.h.b16 %v272
      %v551 = vunpack.c.l.b16 %v273
      %v552 = vunpack.c.h.b16 %v273
      %v553 = vunpack.c.l.b16 %v274
      %v554 = vunpack.c.h.b16 %v274
      %v555 = vunpack.c.l.b16 %v275
      %v556 = vunpack.c.h.b16 %v275
      %v557 = vunpack.c.l.b16 %v276
      %v558 = vunpack.c.h.b16 %v276
      %v559 = vunpack.c.l.b16 %v277
      %v560 = vunpack.c.h.b16 %v277
      %v561 = vunpack.c.l.b16 %v278
      %v562 = vunpack.c.h.b16 %v278
      %v563 = vunpack.c.l.b16 %v279
      %v564 = vunpack.c.h.b16 %v279
      %v565 = vunpack.c.l.b16 %v280
      %v566 = vunpack.c.h.b16 %v280
      %v567 = vunpack.c.l.b16 %v281
      %v568 = vunpack.c.h.b16 %v281
      %v569 = vunpack.c.l.b16 %v282
      %v570 = vunpack.c.h.b16 %v282
      %v571 = vunpack.c.l.b16 %v283
      %v572 = vunpack.c.h.b16 %v283
      %v573 = vunpack.c.l.b16 %v284
      %v574 = vunpack.c.h.b16 %v284
      %v575 = vunpack.c.l.b16 %v285
      %v576 = vunpack.c.h.b16 %v285
      %v577 = vunpack.c.l.b16 %v286
      %v578 = vunpack.c.h.b16 %v286
      %v579 = vunpack.c.l.b16 %v287
      %v580 = vunpack.c.h.b16 %v287
      %v581 = vunpack.c.l.b16 %v288
      %v582 = vunpack.c.h.b16 %v288
      %v583 = vunpack.c.l.b16 %v289
      %v584 = vunpack.c.h.b16 %v289
      %v585 = vunpack.c.l.b16 %v290
      %v586 = vunpack.c.h.b16 %v290
      %v587 = vunpack.c.l.b16 %v291
      %v588 = vunpack.c.h.b16 %v291
      %v589 = vunpack.c.l.b16 %v292
      %v590 = vunpack.c.h.b16 %v292
      %v591 = vunpack.c.l.b16 %v293
      %v592 = vunpack.c.h.b16 %v293
      %v593 = vunpack.c.l.b16 %v294
      %v594 = vunpack.c.h.b16 %v294
      %v595 = vunpack.c.l.b16 %v295
      %v596 = vunpack.c.h.b16 %v295
      %v597 = vunpack.c.l.b16 %v296
      %v598 = vunpack.c.h.b16 %v296
      %v599 = vunpack.c.l.b16 %v297
      %v600 = vunpack.c.h.b16 %v297
      %v601 = vunpack.c.l.b16 %v298
      %v602 = vunpack.c.h.b16 %v298
      %v603 = vunpack.c.l.b16 %v299
      %v604 = vunpack.c.h.b16 %v299
      %v605 = vunpack.c.l.b16 %v300
      %v606 = vunpack.c.h.b16 %v300
      %v607 = vunpack.c.l.b16 %v301
      %v608 = vunpack.c.h.b16 %v301
      %v609 = vunpack.c.l.b16 %v302
      %v610 = vunpack.c.h.b16 %v302
      %v611 = vunpack.c.l.b16 %v303
      %v612 = vunpack.c.h.b16 %v303
      %v613 = vunpack.c.l.b16 %v304
      %v614 = vunpack.c.h.b16 %v304
      %v615 = vunpack.c.l.b16 %v305
      %v616 = vunpack.c.h.b16 %v305
      %v617 = vunpack.c.l.b16 %v306
      %v618 = vunpack.c.h.b16 %v306
      %v619 = vunpack.c.l.b16 %v307
      %v620 = vunpack.c.h.b16 %v307
      %v621 = vunpack.c.l.b16 %v308
      %v622 = vunpack.c.h.b16 %v308
      %v623 = vunpack.c.l.b16 %v309
      %v624 = vunpack.c.h.b16 %v309
      %v625 = vunpack.c.l.b16 %v310
      %v626 = vunpack.c.h.b16 %v310
      %v627 = vunpack.c.l.b16 %v311
      %v628 = vunpack.c.h.b16 %v311
      %v629 = vunpack.c.l.b16 %v312
      %v630 = vunpack.c.h.b16 %v312
      %v631 = vunpack.c.l.b16 %v313
      %v632 = vunpack.c.h.b16 %v313
      %v633 = vunpack.c.l.b16 %v314
      %v634 = vunpack.c.h.b16 %v314
      %v635 = vunpack.c.l.b16 %v315
      %v636 = vunpack.c.h.b16 %v315
      %v637 = vunpack.c.l.b16 %v316
      %v638 = vunpack.c.h.b16 %v316
      %v639 = vunpack.c.l.b16 %v317
      %v640 = vunpack.c.h.b16 %v317
      %v641 = vunpack.c.l.b16 %v318
      %v642 = vunpack.c.h.b16 %v318
      %v643 = vunpack.c.l.b16 %v319
      %v644 = vunpack.c.h.b16 %v319
      %v645 = vunpack.c.l.b16 %v320
      %v646 = vunpack.c.h.b16 %v320
      %v647 = vunpack.c.l.b16 %v321
      %v648 = vunpack.c.h.b16 %v321
      %v649 = vunpack.c.l.b16 %v322
      %v650 = vunpack.c.h.b16 %v322
      %v651 = vunpack.c.l.b16 %v323
      %v652 = vunpack.c.h.b16 %v323
      %v653 = vunpack.c.l.b16 %v324
      %v654 = vunpack.c.h.b16 %v324
      %v655 = vunpack.c.l.b16 %v325
      %v656 = vunpack.c.h.b16 %v325
      %v657 = vunpack.c.l.b16 %v326
      %v658 = vunpack.c.h.b16 %v326
      %v659 = vunpack.c.l.b16 %v327
      %v660 = vunpack.c.h.b16 %v327
      %v661 = vunpack.c.l.b16 %v328
      %v662 = vunpack.c.h.b16 %v328
      %v663 = vunpack.c.l.b16 %v329
      %v664 = vunpack.c.h.b16 %v329
      %v665 = vunpack.c.l.b16 %v330
      %v666 = vunpack.c.h.b16 %v330
      %v667 = vunpack.c.l.b16 %v331
      %v668 = vunpack.c.h.b16 %v331
      %v669 = vunpack.c.l.b16 %v332
      %v670 = vunpack.c.h.b16 %v332
      %v671 = vunpack.c.l.b16 %v333
      %v672 = vunpack.c.h.b16 %v333
      %v673 = vunpack.c.l.b16 %v334
      %v674 = vunpack.c.h.b16 %v334
      %v675 = vunpack.c.l.b16 %v335
      %v676 = vunpack.c.h.b16 %v335
      %v677 = vunpack.c.l.b16 %v336
      %v678 = vunpack.c.h.b16 %v336
      %v679 = vunpack.c.l.b16 %v337
      %v680 = vunpack.c.h.b16 %v337
      %v681 = vunpack.c.l.b16 %v338
      %v682 = vunpack.c.h.b16 %v338
      %v683 = vunpack.c.l.b16 %v339
      %v684 = vunpack.c.h.b16 %v339
      %v685 = vunpack.c.l.b16 %v340
      %v686 = vunpack.c.h.b16 %v340
      %v687 = vunpack.c.l.b16 %v341
      %v688 = vunpack.c.h.b16 %v341
      %v689 = vunpack.c.l.b16 %v342
      %v690 = vunpack.c.h.b16 %v342
      %v691 = vunpack.c.l.b16 %v343
      %v692 = vunpack.c.h.b16 %v343
      %v693 = vunpack.c.l.b16 %v344
      %v694 = vunpack.c.h.b16 %v344
      %v695 = vunpack.c.l.b16 %v345
      %v696 = vunpack.c.h.b16 %v345
      %v697 = vunpack.c.l.b16 %v346
      %v698 = vunpack.c.h.b16 %v346
      %v699 = vunpack.c.l.b16 %v347
      %v700 = vunpack.c.h.b16 %v347
      %v701 = vunpack.c.l.b16 %v348
      %v702 = vunpack.c.h.b16 %v348
      %v703 = vunpack.c.l.b16 %v349
      %v704 = vunpack.c.h.b16 %v349
      %v705 = vunpack.c.l.b16 %v350
      %v706 = vunpack.c.h.b16 %v350
      %v707 = vunpack.c.l.b16 %v351
      %v708 = vunpack.c.h.b16 %v351
      %v709 = vunpack.c.l.b16 %v352
      %v710 = vunpack.c.h.b16 %v352
      %v711 = vunpack.c.l.b16 %v353
      %v712 = vunpack.c.h.b16 %v353
      %v713 = vunpack.c.l.b16 %v354
      %v714 = vunpack.c.h.b16 %v354
      %v715 = vunpack.c.l.b16 %v355
      %v716 = vunpack.c.h.b16 %v355
      %v717 = vunpack.c.l.b16 %v356
      %v718 = vunpack.c.h.b16 %v356
      %v719 = vunpack.c.l.b16 %v357
      %v720 = vunpack.c.h.b16 %v357
      %v721 = vunpack.c.l.b16 %v358
      %v722 = vunpack.c.h.b16 %v358
      %v723 = vunpack.c.l.b16 %v359
      %v724 = vunpack.c.h.b16 %v359
      %v725 = vunpack.c.l.b16 %v360
      %v726 = vunpack.c.h.b16 %v360
      %v727 = vunpack.c.l.b16 %v361
      %v728 = vunpack.c.h.b16 %v361
      %v729 = vunpack.c.l.b16 %v362
      %v730 = vunpack.c.h.b16 %v362
      %v731 = vunpack.c.l.b16 %v363
      %v732 = vunpack.c.h.b16 %v363
      %v733 = vunpack.c.l.b16 %v364
      %v734 = vunpack.c.h.b16 %v364
      %v735 = vunpack.c.l.b16 %v365
      %v736 = vunpack.c.h.b16 %v365
      %v737 = vunpack.c.l.b16 %v366
      %v738 = vunpack.c.h.b16 %v366
      %v739 = vunpack.c.l.b16 %v367
      %v740 = vunpack.c.h.b16 %v367
      %v741 = vunpack.c.l.b16 %v368
      %v742 = vunpack.c.h.b16 %v368
      %v743 = vunpack.c.l.b16 %v369
      %v744 = vunpack.c.h.b16 %v369
      %v745 = vunpack.c.l.b16 %v370
      %v746 = vunpack.c.h.b16 %v370
      %v747 = vunpack.c.l.b16 %v371
      %v748 = vunpack.c.h.b16 %v371
      %v749 = vunpack.c.l.b16 %v372
      %v750 = vunpack.c.h.b16 %v372
      %v751 = vunpack.c.l.b16 %v373
      %v752 = vunpack.c.h.b16 %v373
      %v753 = vunpack.c.l.b16 %v374
      %v754 = vunpack.c.h.b16 %v374
      %v755 = vunpack.c.l.b16 %v375
      %v756 = vunpack.c.h.b16 %v375
      %v757 = vunpack.c.l.b16 %v376
      %v758 = vunpack.c.h.b16 %v376
      %v759 = vunpack.c.l.b16 %v377
      %v760 = vunpack.c.h.b16 %v377
      %v761 = vunpack.c.l.b16 %v378
      %v762 = vunpack.c.h.b16 %v378
      %v763 = vunpack.c.l.b16 %v379
      %v764 = vunpack.c.h.b16 %v379
      %v765 = vunpack.c.l.b16 %v380
      %v766 = vunpack.c.h.b16 %v380
      %v767 = vunpack.c.l.b16 %v381
      %v768 = vunpack.c.h.b16 %v381
      %v769 = vunpack.c.l.b16 %v382
      %v770 = vunpack.c.h.b16 %v382
      %v771 = vunpack.c.l.b16 %v383
      %v772 = vunpack.c.h.b16 %v383
      %v773 = vunpack.c.l.b16 %v384
      %v774 = vunpack.c.h.b16 %v384
      %v775 = vunpack.c.l.b16 %v385
      %v776 = vunpack.c.h.b16 %v385
      %v777 = vunpack.c.l.b16 %v386
      %v778 = vunpack.c.h.b16 %v386
      %v779 = vunpack.c.l.b16 %v387
      %v780 = vunpack.c.h.b16 %v387
      %v781 = vunpack.c.l.b16 %v388
      %v782 = vunpack.c.h.b16 %v388
      %v783 = vunpack.c.l.b16 %v389
      %v784 = vunpack.c.h.b16 %v389
      %v785 = vunpack.c.l.b16 %v390
      %v786 = vunpack.c.h.b16 %v390
      %v787 = vunpack.c.l.b16 %v391
      %v788 = vunpack.c.h.b16 %v391
      %v789 = vunpack.c.l.b16 %v392
      %v790 = vunpack.c.h.b16 %v392
      %v791 = vunpack.c.l.b16 %v393
      %v792 = vunpack.c.h.b16 %v393
      %v793 = vunpack.c.l.b16 %v394
      %v794 = vunpack.c.h.b16 %v394
      %v795 = vunpack.c.l.b16 %v395
      %v796 = vunpack.c.h.b16 %v395
      %v797 = vunpack.c.l.b16 %v396
      %v798 = vunpack.c.h.b16 %v396
      %v799 = vunpack.c.l.b16 %v397
      %v800 = vunpack.c.h.b16 %v397
      %v801 = vpack.c.b16 %v547, %v545
      %v802 = vpack.c.b16 %v548, %v546
      %v803 = vpack.c.b16 %v551, %v549
      %v804 = vpack.c.b16 %v552, %v550
      %v805 = vpack.c.b16 %v555, %v553
      %v806 = vpack.c.b16 %v556, %v554
      %v807 = vpack.c.b16 %v559, %v557
      %v808 = vpack.c.b16 %v560, %v558
      %v809 = vpack.c.b16 %v563, %v561
      %v810 = vpack.c.b16 %v564, %v562
      %v811 = vpack.c.b16 %v567, %v565
      %v812 = vpack.c.b16 %v568, %v566
      %v813 = vpack.c.b16 %v571, %v569
      %v814 = vpack.c.b16 %v572, %v570
      %v815 = vpack.c.b16 %v575, %v573
      %v816 = vpack.c.b16 %v576, %v574
      %v817 = vpack.c.b16 %v579, %v577
      %v818 = vpack.c.b16 %v580, %v578
      %v819 = vpack.c.b16 %v583, %v581
      %v820 = vpack.c.b16 %v584, %v582
      %v821 = vpack.c.b16 %v587, %v585
      %v822 = vpack.c.b16 %v588, %v586
      %v823 = vpack.c.b16 %v591, %v589
      %v824 = vpack.c.b16 %v592, %v590
      %v825 = vpack.c.b16 %v595, %v593
      %v826 = vpack.c.b16 %v596, %v594
      %v827 = vpack.c.b16 %v599, %v597
      %v828 = vpack.c.b16 %v600, %v598
      %v829 = vpack.c.b16 %v603, %v601
      %v830 = vpack.c.b16 %v604, %v602
      %v831 = vpack.c.b16 %v607, %v605
      %v832 = vpack.c.b16 %v608, %v606
      %v833 = vpack.c.b16 %v611, %v609
      %v834 = vpack.c.b16 %v612, %v610
      %v835 = vpack.c.b16 %v615, %v613
      %v836 = vpack.c.b16 %v616, %v614
      %v837 = vpack.c.b16 %v619, %v617
      %v838 = vpack.c.b16 %v620, %v618
      %v839 = vpack.c.b16 %v623, %v621
      %v840 = vpack.c.b16 %v624, %v622
      %v841 = vpack.c.b16 %v627, %v625
      %v842 = vpack.c.b16 %v628, %v626
      %v843 = vpack.c.b16 %v631, %v629
      %v844 = vpack.c.b16 %v632, %v630
      %v845 = vpack.c.b16 %v635, %v633
      %v846 = vpack.c.b16 %v636, %v634
      %v847 = vpack.c.b16 %v639, %v637
      %v848 = vpack.c.b16 %v640, %v638
      %v849 = vpack.c.b16 %v643, %v641
      %v850 = vpack.c.b16 %v644, %v642
      %v851 = vpack.c.b16 %v647, %v645
      %v852 = vpack.c.b16 %v648, %v646
      %v853 = vpack.c.b16 %v651, %v649
      %v854 = vpack.c.b16 %v652, %v650
      %v855 = vpack.c.b16 %v655, %v653
      %v856 = vpack.c.b16 %v656, %v654
      %v857 = vpack.c.b16 %v659, %v657
      %v858 = vpack.c.b16 %v660, %v658
      %v859 = vpack.c.b16 %v663, %v661
      %v860 = vpack.c.b16 %v664, %v662
      %v861 = vpack.c.b16 %v667, %v665
      %v862 = vpack.c.b16 %v668, %v666
      %v863 = vpack.c.b16 %v671, %v669
      %v864 = vpack.c.b16 %v672, %v670
      %v865 = vpack.c.b16 %v675, %v673
      %v866 = vpack.c.b16 %v676, %v674
      %v867 = vpack.c.b16 %v679, %v677
      %v868 = vpack.c.b16 %v680, %v678
      %v869 = vpack.c.b16 %v683, %v681
      %v870 = vpack.c.b16 %v684, %v682
      %v871 = vpack.c.b16 %v687, %v685
      %v872 = vpack.c.b16 %v688, %v686
      %v873 = vpack.c.b16 %v691, %v689
      %v874 = vpack.c.b16 %v692, %v690
      %v875 = vpack.c.b16 %v695, %v693
      %v876 = vpack.c.b16 %v696, %v694
      %v877 = vpack.c.b16 %v699, %v697
      %v878 = vpack.c.b16 %v700, %v698
      %v879 = vpack.c.b16 %v703, %v701
      %v880 = vpack.c.b16 %v704, %v702
      %v881 = vpack.c.b16 %v707, %v705
      %v882 = vpack.c.b16 %v708, %v706
      %v883 = vpack.c.b16 %v711, %v709
      %v884 = vpack.c.b16 %v712, %v710
      %v885 = vpack.c.b16 %v715, %v713
      %v886 = vpack.c.b16 %v716, %v714
      %v887 = vpack.c.b16 %v719, %v717
      %v888 = vpack.c.b16 %v720, %v718
      %v889 = vpack.c.b16 %v723, %v721
      %v890 = vpack.c.b16 %v724, %v722
      %v891 = vpack.c.b16 %v727, %v725
      %v892 = vpack.c.b16 %v728, %v726
      %v893 = vpack.c.b16 %v731, %v729
      %v894 = vpack.c.b16 %v732, %v730
      %v895 = vpack.c.b16 %v735, %v733
      %v896 = vpack.c.b16 %v736, %v734
      %v897 = vpack.c.b16 %v739, %v737
      %v898 = vpack.c.b16 %v740, %v738
      %v899 = vpack.c.b16 %v743, %v741
      %v900 = vpack.c.b16 %v744, %v742
      %v901 = vpack.c.b16 %v747, %v745
      %v902 = vpack.c.b16 %v748, %v746
      %v903 = vpack.c.b16 %v751, %v749
      %v904 = vpack.c.b16 %v752, %v750
      %v905 = vpack.c.b16 %v755, %v753
      %v906 = vpack.c.b16 %v756, %v754
      %v907 = vpack.c.b16 %v759, %v757
      %v908 = vpack.c.b16 %v760, %v758
      %v909 = vpack.c.b16 %v763, %v761
      %v910 = vpack.c.b16 %v764, %v762
      %v911 = vpack.c.b16 %v767, %v765
      %v912 = vpack.c.b16 %v768, %v766
      %v913 = vpack.c.b16 %v771, %v769
      %v914 = vpack.c.b16 %v772, %v770
      %v915 = vpack.c.b16 %v775, %v773
      %v916 = vpack.c.b16 %v776, %v774
      %v917 = vpack.c.b16 %v779, %v777
      %v918 = vpack.c.b16 %v780, %v778
      %v919 = vpack.c.b16 %v783, %v781
      %v920 = vpack.c.b16 %v784, %v782
      %v921 = vpack.c.b16 %v787, %v785
      %v922 = vpack.c.b16 %v788, %v786
      %v923 = vpack.c.b16 %v791, %v789
      %v924 = vpack.c.b16 %v792, %v790
      %v925 = vpack.c.b16 %v795, %v793
      %v926 = vpack.c.b16 %v796, %v794
      %v927 = vpack.c.b16 %v799, %v797
      %v928 = vpack.c.b16 %v800, %v798
      %v1012 = vunpack.c.l.b16 %v398
      %v1013 = vunpack.c.l.b16 %v399
      %v1014 = vunpack.c.l.b16 %v400
      %v1015 = vunpack.c.l.b16 %v401
      %v1016 = vunpack.c.l.b16 %v402
      %v1017 = vunpack.c.l.b16 %v403
      %v1018 = vunpack.c.l.b16 %v404
      %v1019 = vunpack.c.l.b16 %v405
      %v1020 = vunpack.c.l.b16 %v406
      %v1021 = vunpack.c.l.b16 %v407
      %v1022 = vunpack.c.l.b16 %v408
      %v1023 = vunpack.c.l.b16 %v409
      %v1024 = vunpack.c.l.b16 %v410
      %v1025 = vunpack.c.l.b16 %v411
      %v1026 = vunpack.c.l.b16 %v412
      %v1027 = vunpack.c.l.b16 %v413
      %v1028 = vunpack.c.l.b16 %v414
      %v1029 = vunpack.c.l.b16 %v415
      %v1030 = vunpack.c.l.b16 %v416
      %v1031 = vpack.c.b16 %v1013, %v1012
      %v1032 = vpack.c.b16 %v1015, %v1014
      %v1033 = vpack.c.b16 %v1017, %v1016
      %v1034 = vpack.c.b16 %v1019, %v1018
      %v1035 = vpack.c.b16 %v1021, %v1020
      %v1036 = vpack.c.b16 %v1023, %v1022
      %v1037 = vpack.c.b16 %v1025, %v1024
      %v1038 = vpack.c.b16 %v1027, %v1026
      %v1039 = vpack.c.b16 %v1029, %v1028
      %v1040 = vpack.c.b16 %v1030, %v1030
      %vm1050 = vcmask 154624
      %v1052 = vsel %vm1050, %v802, 0
      %v1055 = vsel %vm1050, %v804, 0
      %v1058 = vsel %vm1050, %v806, 0
      %v1061 = vsel %vm1050, %v808, 0
      %v1064 = vsel %vm1050, %v810, 0
      %v1067 = vsel %vm1050, %v812, 0
      %v1070 = vsel %vm1050, %v814, 0
      %v1073 = vsel %vm1050, %v816, 0
      %v1076 = vsel %vm1050, %v818, 0
      %v1079 = vsel %vm1050, %v820, 0
      %v1082 = vsel %vm1050, %v822, 0
      %v1085 = vsel %vm1050, %v824, 0
      %v1088 = vsel %vm1050, %v826, 0
      %v1091 = vsel %vm1050, %v828, 0
      %v1094 = vsel %vm1050, %v830, 0
      %v1097 = vsel %vm1050, %v832, 0
      %v1100 = vsel %vm1050, %v834, 0
      %v1103 = vsel %vm1050, %v836, 0
      %v1106 = vsel %vm1050, %v838, 0
      %v1109 = vsel %vm1050, %v840, 0
      %v1112 = vsel %vm1050, %v842, 0
      %v1115 = vsel %vm1050, %v844, 0
      %v1118 = vsel %vm1050, %v846, 0
      %v1121 = vsel %vm1050, %v848, 0
      %v1124 = vsel %vm1050, %v850, 0
      %v1127 = vsel %vm1050, %v852, 0
      %v1130 = vsel %vm1050, %v854, 0
      %v1133 = vsel %vm1050, %v856, 0
      %v1136 = vsel %vm1050, %v858, 0
      %v1139 = vsel %vm1050, %v860, 0
      %v1142 = vsel %vm1050, %v862, 0
      %v1145 = vsel %vm1050, %v864, 0
      %v1148 = vsel %vm1050, %v866, 0
      %v1151 = vsel %vm1050, %v868, 0
      %v1154 = vsel %vm1050, %v870, 0
      %v1157 = vsel %vm1050, %v872, 0
      %v1160 = vsel %vm1050, %v874, 0
      %v1163 = vsel %vm1050, %v876, 0
      %v1166 = vsel %vm1050, %v878, 0
      %v1169 = vsel %vm1050, %v880, 0
      %v1172 = vsel %vm1050, %v882, 0
      %v1175 = vsel %vm1050, %v884, 0
      %v1178 = vsel %vm1050, %v886, 0
      %v1181 = vsel %vm1050, %v888, 0
      %v1184 = vsel %vm1050, %v890, 0
      %v1187 = vsel %vm1050, %v892, 0
      %v1190 = vsel %vm1050, %v894, 0
      %v1193 = vsel %vm1050, %v896, 0
      %v1196 = vsel %vm1050, %v898, 0
      %v1199 = vsel %vm1050, %v900, 0
      %v1202 = vsel %vm1050, %v902, 0
      %v1205 = vsel %vm1050, %v904, 0
      %v1208 = vsel %vm1050, %v906, 0
      %v1211 = vsel %vm1050, %v908, 0
      %v1214 = vsel %vm1050, %v910, 0
      %v1217 = vsel %vm1050, %v912, 0
      %v1220 = vsel %vm1050, %v914, 0
      %v1223 = vsel %vm1050, %v916, 0
      %v1226 = vsel %vm1050, %v918, 0
      %v1229 = vsel %vm1050, %v920, 0
      %v1232 = vsel %vm1050, %v922, 0
      %v1235 = vsel %vm1050, %v924, 0
      %v1238 = vsel %vm1050, %v926, 0
      %v1241 = vsel %vm1050, %v928, 0
      %vm1243 = vcmask 1040384
      %vm1244 = vcmask 1041408
      %v1245 = vsel %vm1243, 4294967295, 65535
      %v1246 = vsel %vm1244, %v1245, 0
      %v1248 = vand.u32 %v1040, %v1246
      %1250 = vmatpush.bf16.msra.mxu0 %v1038
      %1251 = vmatpush.bf16.msra.mxu0 %v1037
      %1252 = vmatpush.bf16.msra.mxu0 %v1036
      %1253 = vmatpush.bf16.msra.mxu0 %v1035
      %1254 = vmatpush.bf16.msra.mxu0 %v1034
      %1255 = vmatpush.bf16.msra.mxu0 %v1033
      %1256 = vmatpush.bf16.msra.mxu0 %v1032
      %1257 = vmatpush.bf16.msra.mxu0 %v1031
      %1258 = vmatmul.bf16.gmra.mxu0 %v801
      %v1259 = vpop.f32.mrf.mxu0
      %v1260 = vadd.f32 0.0, %v1259
      %v1261 = vpop.f32.mrf.mxu0
      %v1262 = vadd.f32 0.0, %v1261
      %1263 = vmatmul.bf16.gmra.mxu0 %v803
      %v1264 = vpop.f32.mrf.mxu0
      %v1265 = vadd.f32 0.0, %v1264
      %v1266 = vpop.f32.mrf.mxu0
      %v1267 = vadd.f32 0.0, %v1266
      %1268 = vmatmul.bf16.gmra.mxu0 %v805
      %v1269 = vpop.f32.mrf.mxu0
      %v1270 = vadd.f32 0.0, %v1269
      %v1271 = vpop.f32.mrf.mxu0
      %v1272 = vadd.f32 0.0, %v1271
      %1273 = vmatmul.bf16.gmra.mxu0 %v807
      %v1274 = vpop.f32.mrf.mxu0
      %v1275 = vadd.f32 0.0, %v1274
      %v1276 = vpop.f32.mrf.mxu0
      %v1277 = vadd.f32 0.0, %v1276
      %1278 = vmatmul.bf16.gmra.mxu0 %v809
      %v1279 = vpop.f32.mrf.mxu0
      %v1280 = vadd.f32 0.0, %v1279
      %v1281 = vpop.f32.mrf.mxu0
      %v1282 = vadd.f32 0.0, %v1281
      %1283 = vmatmul.bf16.gmra.mxu0 %v811
      %v1284 = vpop.f32.mrf.mxu0
      %v1285 = vadd.f32 0.0, %v1284
      %v1286 = vpop.f32.mrf.mxu0
      %v1287 = vadd.f32 0.0, %v1286
      %1288 = vmatmul.bf16.gmra.mxu0 %v813
      %v1289 = vpop.f32.mrf.mxu0
      %v1290 = vadd.f32 0.0, %v1289
      %v1291 = vpop.f32.mrf.mxu0
      %v1292 = vadd.f32 0.0, %v1291
      %1293 = vmatmul.bf16.gmra.mxu0 %v815
      %v1294 = vpop.f32.mrf.mxu0
      %v1295 = vadd.f32 0.0, %v1294
      %v1296 = vpop.f32.mrf.mxu0
      %v1297 = vadd.f32 0.0, %v1296
      %1298 = vmatmul.bf16.gmra.mxu0 %v817
      %v1299 = vpop.f32.mrf.mxu0
      %v1300 = vadd.f32 0.0, %v1299
      %v1301 = vpop.f32.mrf.mxu0
      %v1302 = vadd.f32 0.0, %v1301
      %1303 = vmatmul.bf16.gmra.mxu0 %v819
      %v1304 = vpop.f32.mrf.mxu0
      %v1305 = vadd.f32 0.0, %v1304
      %v1306 = vpop.f32.mrf.mxu0
      %v1307 = vadd.f32 0.0, %v1306
      %1308 = vmatmul.bf16.gmra.mxu0 %v821
      %v1309 = vpop.f32.mrf.mxu0
      %v1310 = vadd.f32 0.0, %v1309
      %v1311 = vpop.f32.mrf.mxu0
      %v1312 = vadd.f32 0.0, %v1311
      %1313 = vmatmul.bf16.gmra.mxu0 %v823
      %v1314 = vpop.f32.mrf.mxu0
      %v1315 = vadd.f32 0.0, %v1314
      %v1316 = vpop.f32.mrf.mxu0
      %v1317 = vadd.f32 0.0, %v1316
      %1318 = vmatmul.bf16.gmra.mxu0 %v825
      %v1319 = vpop.f32.mrf.mxu0
      %v1320 = vadd.f32 0.0, %v1319
      %v1321 = vpop.f32.mrf.mxu0
      %v1322 = vadd.f32 0.0, %v1321
      %1323 = vmatmul.bf16.gmra.mxu0 %v827
      %v1324 = vpop.f32.mrf.mxu0
      %v1325 = vadd.f32 0.0, %v1324
      %v1326 = vpop.f32.mrf.mxu0
      %v1327 = vadd.f32 0.0, %v1326
      %1328 = vmatmul.bf16.gmra.mxu0 %v829
      %v1329 = vpop.f32.mrf.mxu0
      %v1330 = vadd.f32 0.0, %v1329
      %v1331 = vpop.f32.mrf.mxu0
      %v1332 = vadd.f32 0.0, %v1331
      %1333 = vmatmul.bf16.gmra.mxu0 %v831
      %v1334 = vpop.f32.mrf.mxu0
      %v1335 = vadd.f32 0.0, %v1334
      %v1336 = vpop.f32.mrf.mxu0
      %v1337 = vadd.f32 0.0, %v1336
      %1338 = vmatmul.bf16.gmra.mxu0 %v833
      %v1339 = vpop.f32.mrf.mxu0
      %v1340 = vadd.f32 0.0, %v1339
      %v1341 = vpop.f32.mrf.mxu0
      %v1342 = vadd.f32 0.0, %v1341
      %1343 = vmatmul.bf16.gmra.mxu0 %v835
      %v1344 = vpop.f32.mrf.mxu0
      %v1345 = vadd.f32 0.0, %v1344
      %v1346 = vpop.f32.mrf.mxu0
      %v1347 = vadd.f32 0.0, %v1346
      %1348 = vmatmul.bf16.gmra.mxu0 %v837
      %v1349 = vpop.f32.mrf.mxu0
      %v1350 = vadd.f32 0.0, %v1349
      %v1351 = vpop.f32.mrf.mxu0
      %v1352 = vadd.f32 0.0, %v1351
      %1353 = vmatmul.bf16.gmra.mxu0 %v839
      %v1354 = vpop.f32.mrf.mxu0
      %v1355 = vadd.f32 0.0, %v1354
      %v1356 = vpop.f32.mrf.mxu0
      %v1357 = vadd.f32 0.0, %v1356
      %1358 = vmatmul.bf16.gmra.mxu0 %v841
      %v1359 = vpop.f32.mrf.mxu0
      %v1360 = vadd.f32 0.0, %v1359
      %v1361 = vpop.f32.mrf.mxu0
      %v1362 = vadd.f32 0.0, %v1361
      %1363 = vmatmul.bf16.gmra.mxu0 %v843
      %v1364 = vpop.f32.mrf.mxu0
      %v1365 = vadd.f32 0.0, %v1364
      %v1366 = vpop.f32.mrf.mxu0
      %v1367 = vadd.f32 0.0, %v1366
      %1368 = vmatmul.bf16.gmra.mxu0 %v845
      %v1369 = vpop.f32.mrf.mxu0
      %v1370 = vadd.f32 0.0, %v1369
      %v1371 = vpop.f32.mrf.mxu0
      %v1372 = vadd.f32 0.0, %v1371
      %1373 = vmatmul.bf16.gmra.mxu0 %v847
      %v1374 = vpop.f32.mrf.mxu0
      %v1375 = vadd.f32 0.0, %v1374
      %v1376 = vpop.f32.mrf.mxu0
      %v1377 = vadd.f32 0.0, %v1376
      %1378 = vmatmul.bf16.gmra.mxu0 %v849
      %v1379 = vpop.f32.mrf.mxu0
      %v1380 = vadd.f32 0.0, %v1379
      %v1381 = vpop.f32.mrf.mxu0
      %v1382 = vadd.f32 0.0, %v1381
      %1383 = vmatmul.bf16.gmra.mxu0 %v851
      %v1384 = vpop.f32.mrf.mxu0
      %v1385 = vadd.f32 0.0, %v1384
      %v1386 = vpop.f32.mrf.mxu0
      %v1387 = vadd.f32 0.0, %v1386
      %1388 = vmatmul.bf16.gmra.mxu0 %v853
      %v1389 = vpop.f32.mrf.mxu0
      %v1390 = vadd.f32 0.0, %v1389
      %v1391 = vpop.f32.mrf.mxu0
      %v1392 = vadd.f32 0.0, %v1391
      %1393 = vmatmul.bf16.gmra.mxu0 %v855
      %v1394 = vpop.f32.mrf.mxu0
      %v1395 = vadd.f32 0.0, %v1394
      %v1396 = vpop.f32.mrf.mxu0
      %v1397 = vadd.f32 0.0, %v1396
      %1398 = vmatmul.bf16.gmra.mxu0 %v857
      %v1399 = vpop.f32.mrf.mxu0
      %v1400 = vadd.f32 0.0, %v1399
      %v1401 = vpop.f32.mrf.mxu0
      %v1402 = vadd.f32 0.0, %v1401
      %1403 = vmatmul.bf16.gmra.mxu0 %v859
      %v1404 = vpop.f32.mrf.mxu0
      %v1405 = vadd.f32 0.0, %v1404
      %v1406 = vpop.f32.mrf.mxu0
      %v1407 = vadd.f32 0.0, %v1406
      %1408 = vmatmul.bf16.gmra.mxu0 %v861
      %v1409 = vpop.f32.mrf.mxu0
      %v1410 = vadd.f32 0.0, %v1409
      %v1411 = vpop.f32.mrf.mxu0
      %v1412 = vadd.f32 0.0, %v1411
      %1413 = vmatmul.bf16.gmra.mxu0 %v863
      %v1414 = vpop.f32.mrf.mxu0
      %v1415 = vadd.f32 0.0, %v1414
      %v1416 = vpop.f32.mrf.mxu0
      %v1417 = vadd.f32 0.0, %v1416
      %1418 = vmatmul.bf16.gmra.mxu0 %v865
      %v1419 = vpop.f32.mrf.mxu0
      %v1420 = vadd.f32 0.0, %v1419
      %v1421 = vpop.f32.mrf.mxu0
      %v1422 = vadd.f32 0.0, %v1421
      %1423 = vmatmul.bf16.gmra.mxu0 %v867
      %v1424 = vpop.f32.mrf.mxu0
      %v1425 = vadd.f32 0.0, %v1424
      %v1426 = vpop.f32.mrf.mxu0
      %v1427 = vadd.f32 0.0, %v1426
      %1428 = vmatmul.bf16.gmra.mxu0 %v869
      %v1429 = vpop.f32.mrf.mxu0
      %v1430 = vadd.f32 0.0, %v1429
      %v1431 = vpop.f32.mrf.mxu0
      %v1432 = vadd.f32 0.0, %v1431
      %1433 = vmatmul.bf16.gmra.mxu0 %v871
      %v1434 = vpop.f32.mrf.mxu0
      %v1435 = vadd.f32 0.0, %v1434
      %v1436 = vpop.f32.mrf.mxu0
      %v1437 = vadd.f32 0.0, %v1436
      %1438 = vmatmul.bf16.gmra.mxu0 %v873
      %v1439 = vpop.f32.mrf.mxu0
      %v1440 = vadd.f32 0.0, %v1439
      %v1441 = vpop.f32.mrf.mxu0
      %v1442 = vadd.f32 0.0, %v1441
      %1443 = vmatmul.bf16.gmra.mxu0 %v875
      %v1444 = vpop.f32.mrf.mxu0
      %v1445 = vadd.f32 0.0, %v1444
      %v1446 = vpop.f32.mrf.mxu0
      %v1447 = vadd.f32 0.0, %v1446
      %1448 = vmatmul.bf16.gmra.mxu0 %v877
      %v1449 = vpop.f32.mrf.mxu0
      %v1450 = vadd.f32 0.0, %v1449
      %v1451 = vpop.f32.mrf.mxu0
      %v1452 = vadd.f32 0.0, %v1451
      %1453 = vmatmul.bf16.gmra.mxu0 %v879
      %v1454 = vpop.f32.mrf.mxu0
      %v1455 = vadd.f32 0.0, %v1454
      %v1456 = vpop.f32.mrf.mxu0
      %v1457 = vadd.f32 0.0, %v1456
      %1458 = vmatmul.bf16.gmra.mxu0 %v881
      %v1459 = vpop.f32.mrf.mxu0
      %v1460 = vadd.f32 0.0, %v1459
      %v1461 = vpop.f32.mrf.mxu0
      %v1462 = vadd.f32 0.0, %v1461
      %1463 = vmatmul.bf16.gmra.mxu0 %v883
      %v1464 = vpop.f32.mrf.mxu0
      %v1465 = vadd.f32 0.0, %v1464
      %v1466 = vpop.f32.mrf.mxu0
      %v1467 = vadd.f32 0.0, %v1466
      %1468 = vmatmul.bf16.gmra.mxu0 %v885
      %v1469 = vpop.f32.mrf.mxu0
      %v1470 = vadd.f32 0.0, %v1469
      %v1471 = vpop.f32.mrf.mxu0
      %v1472 = vadd.f32 0.0, %v1471
      %1473 = vmatmul.bf16.gmra.mxu0 %v887
      %v1474 = vpop.f32.mrf.mxu0
      %v1475 = vadd.f32 0.0, %v1474
      %v1476 = vpop.f32.mrf.mxu0
      %v1477 = vadd.f32 0.0, %v1476
      %1478 = vmatmul.bf16.gmra.mxu0 %v889
      %v1479 = vpop.f32.mrf.mxu0
      %v1480 = vadd.f32 0.0, %v1479
      %v1481 = vpop.f32.mrf.mxu0
      %v1482 = vadd.f32 0.0, %v1481
      %1483 = vmatmul.bf16.gmra.mxu0 %v891
      %v1484 = vpop.f32.mrf.mxu0
      %v1485 = vadd.f32 0.0, %v1484
      %v1486 = vpop.f32.mrf.mxu0
      %v1487 = vadd.f32 0.0, %v1486
      %1488 = vmatmul.bf16.gmra.mxu0 %v893
      %v1489 = vpop.f32.mrf.mxu0
      %v1490 = vadd.f32 0.0, %v1489
      %v1491 = vpop.f32.mrf.mxu0
      %v1492 = vadd.f32 0.0, %v1491
      %1493 = vmatmul.bf16.gmra.mxu0 %v895
      %v1494 = vpop.f32.mrf.mxu0
      %v1495 = vadd.f32 0.0, %v1494
      %v1496 = vpop.f32.mrf.mxu0
      %v1497 = vadd.f32 0.0, %v1496
      %1498 = vmatmul.bf16.gmra.mxu0 %v897
      %v1499 = vpop.f32.mrf.mxu0
      %v1500 = vadd.f32 0.0, %v1499
      %v1501 = vpop.f32.mrf.mxu0
      %v1502 = vadd.f32 0.0, %v1501
      %1503 = vmatmul.bf16.gmra.mxu0 %v899
      %v1504 = vpop.f32.mrf.mxu0
      %v1505 = vadd.f32 0.0, %v1504
      %v1506 = vpop.f32.mrf.mxu0
      %v1507 = vadd.f32 0.0, %v1506
      %1508 = vmatmul.bf16.gmra.mxu0 %v901
      %v1509 = vpop.f32.mrf.mxu0
      %v1510 = vadd.f32 0.0, %v1509
      %v1511 = vpop.f32.mrf.mxu0
      %v1512 = vadd.f32 0.0, %v1511
      %1513 = vmatmul.bf16.gmra.mxu0 %v903
      %v1514 = vpop.f32.mrf.mxu0
      %v1515 = vadd.f32 0.0, %v1514
      %v1516 = vpop.f32.mrf.mxu0
      %v1517 = vadd.f32 0.0, %v1516
      %1518 = vmatmul.bf16.gmra.mxu0 %v905
      %v1519 = vpop.f32.mrf.mxu0
      %v1520 = vadd.f32 0.0, %v1519
      %v1521 = vpop.f32.mrf.mxu0
      %v1522 = vadd.f32 0.0, %v1521
      %1523 = vmatmul.bf16.gmra.mxu0 %v907
      %v1524 = vpop.f32.mrf.mxu0
      %v1525 = vadd.f32 0.0, %v1524
      %v1526 = vpop.f32.mrf.mxu0
      %v1527 = vadd.f32 0.0, %v1526
      %1528 = vmatmul.bf16.gmra.mxu0 %v909
      %v1529 = vpop.f32.mrf.mxu0
      %v1530 = vadd.f32 0.0, %v1529
      %v1531 = vpop.f32.mrf.mxu0
      %v1532 = vadd.f32 0.0, %v1531
      %1533 = vmatmul.bf16.gmra.mxu0 %v911
      %v1534 = vpop.f32.mrf.mxu0
      %v1535 = vadd.f32 0.0, %v1534
      %v1536 = vpop.f32.mrf.mxu0
      %v1537 = vadd.f32 0.0, %v1536
      %1538 = vmatmul.bf16.gmra.mxu0 %v913
      %v1539 = vpop.f32.mrf.mxu0
      %v1540 = vadd.f32 0.0, %v1539
      %v1541 = vpop.f32.mrf.mxu0
      %v1542 = vadd.f32 0.0, %v1541
      %1543 = vmatmul.bf16.gmra.mxu0 %v915
      %v1544 = vpop.f32.mrf.mxu0
      %v1545 = vadd.f32 0.0, %v1544
      %v1546 = vpop.f32.mrf.mxu0
      %v1547 = vadd.f32 0.0, %v1546
      %1548 = vmatmul.bf16.gmra.mxu0 %v917
      %v1549 = vpop.f32.mrf.mxu0
      %v1550 = vadd.f32 0.0, %v1549
      %v1551 = vpop.f32.mrf.mxu0
      %v1552 = vadd.f32 0.0, %v1551
      %1553 = vmatmul.bf16.gmra.mxu0 %v919
      %v1554 = vpop.f32.mrf.mxu0
      %v1555 = vadd.f32 0.0, %v1554
      %v1556 = vpop.f32.mrf.mxu0
      %v1557 = vadd.f32 0.0, %v1556
      %1558 = vmatmul.bf16.gmra.mxu0 %v921
      %v1559 = vpop.f32.mrf.mxu0
      %v1560 = vadd.f32 0.0, %v1559
      %v1561 = vpop.f32.mrf.mxu0
      %v1562 = vadd.f32 0.0, %v1561
      %1563 = vmatmul.bf16.gmra.mxu0 %v923
      %v1564 = vpop.f32.mrf.mxu0
      %v1565 = vadd.f32 0.0, %v1564
      %v1566 = vpop.f32.mrf.mxu0
      %v1567 = vadd.f32 0.0, %v1566
      %1568 = vmatmul.bf16.gmra.mxu0 %v925
      %v1569 = vpop.f32.mrf.mxu0
      %v1570 = vadd.f32 0.0, %v1569
      %v1571 = vpop.f32.mrf.mxu0
      %v1572 = vadd.f32 0.0, %v1571
      %1573 = vmatmul.bf16.gmra.mxu0 %v927
      %v1574 = vpop.f32.mrf.mxu0
      %v1575 = vadd.f32 0.0, %v1574
      %v1576 = vpop.f32.mrf.mxu0
      %v1577 = vadd.f32 0.0, %v1576
      %1578 = vdwg.mxu0
      %1579 = vmatpush.bf16.msra.mxu0 0
      %1580 = vmatpush.bf16.msra.mxu0 0
      %1581 = vmatpush.bf16.msra.mxu0 0
      %1582 = vmatpush.bf16.msra.mxu0 0
      %1583 = vmatpush.bf16.msra.mxu0 0
      %1584 = vmatpush.bf16.msra.mxu0 0
      %1585 = vmatpush.bf16.msra.mxu0 %v1248
      %1586 = vmatpush.bf16.msra.mxu0 %v1039
      %1587 = vmatmul.bf16.gmra.mxu0 %v1052
      %v1588 = vpop.f32.mrf.mxu0
      %v1589 = vadd.f32 %v1260, %v1588
      %v1590 = vpop.f32.mrf.mxu0
      %v1591 = vadd.f32 %v1262, %v1590
      %1592 = vmatmul.bf16.gmra.mxu0 %v1055
      %v1593 = vpop.f32.mrf.mxu0
      %v1594 = vadd.f32 %v1265, %v1593
      %v1595 = vpop.f32.mrf.mxu0
      %v1596 = vadd.f32 %v1267, %v1595
      %1597 = vmatmul.bf16.gmra.mxu0 %v1058
      %v1598 = vpop.f32.mrf.mxu0
      %v1599 = vadd.f32 %v1270, %v1598
      %v1600 = vpop.f32.mrf.mxu0
      %v1601 = vadd.f32 %v1272, %v1600
      %1602 = vmatmul.bf16.gmra.mxu0 %v1061
      %v1603 = vpop.f32.mrf.mxu0
      %v1604 = vadd.f32 %v1275, %v1603
      %v1605 = vpop.f32.mrf.mxu0
      %v1606 = vadd.f32 %v1277, %v1605
      %1607 = vmatmul.bf16.gmra.mxu0 %v1064
      %v1608 = vpop.f32.mrf.mxu0
      %v1609 = vadd.f32 %v1280, %v1608
      %v1610 = vpop.f32.mrf.mxu0
      %v1611 = vadd.f32 %v1282, %v1610
      %1612 = vmatmul.bf16.gmra.mxu0 %v1067
      %v1613 = vpop.f32.mrf.mxu0
      %v1614 = vadd.f32 %v1285, %v1613
      %v1615 = vpop.f32.mrf.mxu0
      %v1616 = vadd.f32 %v1287, %v1615
      %1617 = vmatmul.bf16.gmra.mxu0 %v1070
      %v1618 = vpop.f32.mrf.mxu0
      %v1619 = vadd.f32 %v1290, %v1618
      %v1620 = vpop.f32.mrf.mxu0
      %v1621 = vadd.f32 %v1292, %v1620
      %1622 = vmatmul.bf16.gmra.mxu0 %v1073
      %v1623 = vpop.f32.mrf.mxu0
      %v1624 = vadd.f32 %v1295, %v1623
      %v1625 = vpop.f32.mrf.mxu0
      %v1626 = vadd.f32 %v1297, %v1625
      %1627 = vmatmul.bf16.gmra.mxu0 %v1076
      %v1628 = vpop.f32.mrf.mxu0
      %v1629 = vadd.f32 %v1300, %v1628
      %v1630 = vpop.f32.mrf.mxu0
      %v1631 = vadd.f32 %v1302, %v1630
      %1632 = vmatmul.bf16.gmra.mxu0 %v1079
      %v1633 = vpop.f32.mrf.mxu0
      %v1634 = vadd.f32 %v1305, %v1633
      %v1635 = vpop.f32.mrf.mxu0
      %v1636 = vadd.f32 %v1307, %v1635
      %1637 = vmatmul.bf16.gmra.mxu0 %v1082
      %v1638 = vpop.f32.mrf.mxu0
      %v1639 = vadd.f32 %v1310, %v1638
      %v1640 = vpop.f32.mrf.mxu0
      %v1641 = vadd.f32 %v1312, %v1640
      %1642 = vmatmul.bf16.gmra.mxu0 %v1085
      %v1643 = vpop.f32.mrf.mxu0
      %v1644 = vadd.f32 %v1315, %v1643
      %v1645 = vpop.f32.mrf.mxu0
      %v1646 = vadd.f32 %v1317, %v1645
      %1647 = vmatmul.bf16.gmra.mxu0 %v1088
      %v1648 = vpop.f32.mrf.mxu0
      %v1649 = vadd.f32 %v1320, %v1648
      %v1650 = vpop.f32.mrf.mxu0
      %v1651 = vadd.f32 %v1322, %v1650
      %1652 = vmatmul.bf16.gmra.mxu0 %v1091
      %v1653 = vpop.f32.mrf.mxu0
      %v1654 = vadd.f32 %v1325, %v1653
      %v1655 = vpop.f32.mrf.mxu0
      %v1656 = vadd.f32 %v1327, %v1655
      %1657 = vmatmul.bf16.gmra.mxu0 %v1094
      %v1658 = vpop.f32.mrf.mxu0
      %v1659 = vadd.f32 %v1330, %v1658
      %v1660 = vpop.f32.mrf.mxu0
      %v1661 = vadd.f32 %v1332, %v1660
      %1662 = vmatmul.bf16.gmra.mxu0 %v1097
      %v1663 = vpop.f32.mrf.mxu0
      %v1664 = vadd.f32 %v1335, %v1663
      %v1665 = vpop.f32.mrf.mxu0
      %v1666 = vadd.f32 %v1337, %v1665
      %1667 = vmatmul.bf16.gmra.mxu0 %v1100
      %v1668 = vpop.f32.mrf.mxu0
      %v1669 = vadd.f32 %v1340, %v1668
      %v1670 = vpop.f32.mrf.mxu0
      %v1671 = vadd.f32 %v1342, %v1670
      %1672 = vmatmul.bf16.gmra.mxu0 %v1103
      %v1673 = vpop.f32.mrf.mxu0
      %v1674 = vadd.f32 %v1345, %v1673
      %v1675 = vpop.f32.mrf.mxu0
      %v1676 = vadd.f32 %v1347, %v1675
      %1677 = vmatmul.bf16.gmra.mxu0 %v1106
      %v1678 = vpop.f32.mrf.mxu0
      %v1679 = vadd.f32 %v1350, %v1678
      %v1680 = vpop.f32.mrf.mxu0
      %v1681 = vadd.f32 %v1352, %v1680
      %1682 = vmatmul.bf16.gmra.mxu0 %v1109
      %v1683 = vpop.f32.mrf.mxu0
      %v1684 = vadd.f32 %v1355, %v1683
      %v1685 = vpop.f32.mrf.mxu0
      %v1686 = vadd.f32 %v1357, %v1685
      %1687 = vmatmul.bf16.gmra.mxu0 %v1112
      %v1688 = vpop.f32.mrf.mxu0
      %v1689 = vadd.f32 %v1360, %v1688
      %v1690 = vpop.f32.mrf.mxu0
      %v1691 = vadd.f32 %v1362, %v1690
      %1692 = vmatmul.bf16.gmra.mxu0 %v1115
      %v1693 = vpop.f32.mrf.mxu0
      %v1694 = vadd.f32 %v1365, %v1693
      %v1695 = vpop.f32.mrf.mxu0
      %v1696 = vadd.f32 %v1367, %v1695
      %1697 = vmatmul.bf16.gmra.mxu0 %v1118
      %v1698 = vpop.f32.mrf.mxu0
      %v1699 = vadd.f32 %v1370, %v1698
      %v1700 = vpop.f32.mrf.mxu0
      %v1701 = vadd.f32 %v1372, %v1700
      %1702 = vmatmul.bf16.gmra.mxu0 %v1121
      %v1703 = vpop.f32.mrf.mxu0
      %v1704 = vadd.f32 %v1375, %v1703
      %v1705 = vpop.f32.mrf.mxu0
      %v1706 = vadd.f32 %v1377, %v1705
      %1707 = vmatmul.bf16.gmra.mxu0 %v1124
      %v1708 = vpop.f32.mrf.mxu0
      %v1709 = vadd.f32 %v1380, %v1708
      %v1710 = vpop.f32.mrf.mxu0
      %v1711 = vadd.f32 %v1382, %v1710
      %1712 = vmatmul.bf16.gmra.mxu0 %v1127
      %v1713 = vpop.f32.mrf.mxu0
      %v1714 = vadd.f32 %v1385, %v1713
      %v1715 = vpop.f32.mrf.mxu0
      %v1716 = vadd.f32 %v1387, %v1715
      %1717 = vmatmul.bf16.gmra.mxu0 %v1130
      %v1718 = vpop.f32.mrf.mxu0
      %v1719 = vadd.f32 %v1390, %v1718
      %v1720 = vpop.f32.mrf.mxu0
      %v1721 = vadd.f32 %v1392, %v1720
      %1722 = vmatmul.bf16.gmra.mxu0 %v1133
      %v1723 = vpop.f32.mrf.mxu0
      %v1724 = vadd.f32 %v1395, %v1723
      %v1725 = vpop.f32.mrf.mxu0
      %v1726 = vadd.f32 %v1397, %v1725
      %1727 = vmatmul.bf16.gmra.mxu0 %v1136
      %v1728 = vpop.f32.mrf.mxu0
      %v1729 = vadd.f32 %v1400, %v1728
      %v1730 = vpop.f32.mrf.mxu0
      %v1731 = vadd.f32 %v1402, %v1730
      %1732 = vmatmul.bf16.gmra.mxu0 %v1139
      %v1733 = vpop.f32.mrf.mxu0
      %v1734 = vadd.f32 %v1405, %v1733
      %v1735 = vpop.f32.mrf.mxu0
      %v1736 = vadd.f32 %v1407, %v1735
      %1737 = vmatmul.bf16.gmra.mxu0 %v1142
      %v1738 = vpop.f32.mrf.mxu0
      %v1739 = vadd.f32 %v1410, %v1738
      %v1740 = vpop.f32.mrf.mxu0
      %v1741 = vadd.f32 %v1412, %v1740
      %1742 = vmatmul.bf16.gmra.mxu0 %v1145
      %v1743 = vpop.f32.mrf.mxu0
      %v1744 = vadd.f32 %v1415, %v1743
      %v1745 = vpop.f32.mrf.mxu0
      %v1746 = vadd.f32 %v1417, %v1745
      %1747 = vmatmul.bf16.gmra.mxu0 %v1148
      %v1748 = vpop.f32.mrf.mxu0
      %v1749 = vadd.f32 %v1420, %v1748
      %v1750 = vpop.f32.mrf.mxu0
      %v1751 = vadd.f32 %v1422, %v1750
      %1752 = vmatmul.bf16.gmra.mxu0 %v1151
      %v1753 = vpop.f32.mrf.mxu0
      %v1754 = vadd.f32 %v1425, %v1753
      %v1755 = vpop.f32.mrf.mxu0
      %v1756 = vadd.f32 %v1427, %v1755
      %1757 = vmatmul.bf16.gmra.mxu0 %v1154
      %v1758 = vpop.f32.mrf.mxu0
      %v1759 = vadd.f32 %v1430, %v1758
      %v1760 = vpop.f32.mrf.mxu0
      %v1761 = vadd.f32 %v1432, %v1760
      %1762 = vmatmul.bf16.gmra.mxu0 %v1157
      %v1763 = vpop.f32.mrf.mxu0
      %v1764 = vadd.f32 %v1435, %v1763
      %v1765 = vpop.f32.mrf.mxu0
      %v1766 = vadd.f32 %v1437, %v1765
      %1767 = vmatmul.bf16.gmra.mxu0 %v1160
      %v1768 = vpop.f32.mrf.mxu0
      %v1769 = vadd.f32 %v1440, %v1768
      %v1770 = vpop.f32.mrf.mxu0
      %v1771 = vadd.f32 %v1442, %v1770
      %1772 = vmatmul.bf16.gmra.mxu0 %v1163
      %v1773 = vpop.f32.mrf.mxu0
      %v1774 = vadd.f32 %v1445, %v1773
      %v1775 = vpop.f32.mrf.mxu0
      %v1776 = vadd.f32 %v1447, %v1775
      %1777 = vmatmul.bf16.gmra.mxu0 %v1166
      %v1778 = vpop.f32.mrf.mxu0
      %v1779 = vadd.f32 %v1450, %v1778
      %v1780 = vpop.f32.mrf.mxu0
      %v1781 = vadd.f32 %v1452, %v1780
      %1782 = vmatmul.bf16.gmra.mxu0 %v1169
      %v1783 = vpop.f32.mrf.mxu0
      %v1784 = vadd.f32 %v1455, %v1783
      %v1785 = vpop.f32.mrf.mxu0
      %v1786 = vadd.f32 %v1457, %v1785
      %1787 = vmatmul.bf16.gmra.mxu0 %v1172
      %v1788 = vpop.f32.mrf.mxu0
      %v1789 = vadd.f32 %v1460, %v1788
      %v1790 = vpop.f32.mrf.mxu0
      %v1791 = vadd.f32 %v1462, %v1790
      %1792 = vmatmul.bf16.gmra.mxu0 %v1175
      %v1793 = vpop.f32.mrf.mxu0
      %v1794 = vadd.f32 %v1465, %v1793
      %v1795 = vpop.f32.mrf.mxu0
      %v1796 = vadd.f32 %v1467, %v1795
      %1797 = vmatmul.bf16.gmra.mxu0 %v1178
      %v1798 = vpop.f32.mrf.mxu0
      %v1799 = vadd.f32 %v1470, %v1798
      %v1800 = vpop.f32.mrf.mxu0
      %v1801 = vadd.f32 %v1472, %v1800
      %1802 = vmatmul.bf16.gmra.mxu0 %v1181
      %v1803 = vpop.f32.mrf.mxu0
      %v1804 = vadd.f32 %v1475, %v1803
      %v1805 = vpop.f32.mrf.mxu0
      %v1806 = vadd.f32 %v1477, %v1805
      %1807 = vmatmul.bf16.gmra.mxu0 %v1184
      %v1808 = vpop.f32.mrf.mxu0
      %v1809 = vadd.f32 %v1480, %v1808
      %v1810 = vpop.f32.mrf.mxu0
      %v1811 = vadd.f32 %v1482, %v1810
      %1812 = vmatmul.bf16.gmra.mxu0 %v1187
      %v1813 = vpop.f32.mrf.mxu0
      %v1814 = vadd.f32 %v1485, %v1813
      %v1815 = vpop.f32.mrf.mxu0
      %v1816 = vadd.f32 %v1487, %v1815
      %1817 = vmatmul.bf16.gmra.mxu0 %v1190
      %v1818 = vpop.f32.mrf.mxu0
      %v1819 = vadd.f32 %v1490, %v1818
      %v1820 = vpop.f32.mrf.mxu0
      %v1821 = vadd.f32 %v1492, %v1820
      %1822 = vmatmul.bf16.gmra.mxu0 %v1193
      %v1823 = vpop.f32.mrf.mxu0
      %v1824 = vadd.f32 %v1495, %v1823
      %v1825 = vpop.f32.mrf.mxu0
      %v1826 = vadd.f32 %v1497, %v1825
      %1827 = vmatmul.bf16.gmra.mxu0 %v1196
      %v1828 = vpop.f32.mrf.mxu0
      %v1829 = vadd.f32 %v1500, %v1828
      %v1830 = vpop.f32.mrf.mxu0
      %v1831 = vadd.f32 %v1502, %v1830
      %1832 = vmatmul.bf16.gmra.mxu0 %v1199
      %v1833 = vpop.f32.mrf.mxu0
      %v1834 = vadd.f32 %v1505, %v1833
      %v1835 = vpop.f32.mrf.mxu0
      %v1836 = vadd.f32 %v1507, %v1835
      %1837 = vmatmul.bf16.gmra.mxu0 %v1202
      %v1838 = vpop.f32.mrf.mxu0
      %v1839 = vadd.f32 %v1510, %v1838
      %v1840 = vpop.f32.mrf.mxu0
      %v1841 = vadd.f32 %v1512, %v1840
      %1842 = vmatmul.bf16.gmra.mxu0 %v1205
      %v1843 = vpop.f32.mrf.mxu0
      %v1844 = vadd.f32 %v1515, %v1843
      %v1845 = vpop.f32.mrf.mxu0
      %v1846 = vadd.f32 %v1517, %v1845
      %1847 = vmatmul.bf16.gmra.mxu0 %v1208
      %v1848 = vpop.f32.mrf.mxu0
      %v1849 = vadd.f32 %v1520, %v1848
      %v1850 = vpop.f32.mrf.mxu0
      %v1851 = vadd.f32 %v1522, %v1850
      %1852 = vmatmul.bf16.gmra.mxu0 %v1211
      %v1853 = vpop.f32.mrf.mxu0
      %v1854 = vadd.f32 %v1525, %v1853
      %v1855 = vpop.f32.mrf.mxu0
      %v1856 = vadd.f32 %v1527, %v1855
      %1857 = vmatmul.bf16.gmra.mxu0 %v1214
      %v1858 = vpop.f32.mrf.mxu0
      %v1859 = vadd.f32 %v1530, %v1858
      %v1860 = vpop.f32.mrf.mxu0
      %v1861 = vadd.f32 %v1532, %v1860
      %1862 = vmatmul.bf16.gmra.mxu0 %v1217
      %v1863 = vpop.f32.mrf.mxu0
      %v1864 = vadd.f32 %v1535, %v1863
      %v1865 = vpop.f32.mrf.mxu0
      %v1866 = vadd.f32 %v1537, %v1865
      %1867 = vmatmul.bf16.gmra.mxu0 %v1220
      %v1868 = vpop.f32.mrf.mxu0
      %v1869 = vadd.f32 %v1540, %v1868
      %v1870 = vpop.f32.mrf.mxu0
      %v1871 = vadd.f32 %v1542, %v1870
      %1872 = vmatmul.bf16.gmra.mxu0 %v1223
      %v1873 = vpop.f32.mrf.mxu0
      %v1874 = vadd.f32 %v1545, %v1873
      %v1875 = vpop.f32.mrf.mxu0
      %v1876 = vadd.f32 %v1547, %v1875
      %1877 = vmatmul.bf16.gmra.mxu0 %v1226
      %v1878 = vpop.f32.mrf.mxu0
      %v1879 = vadd.f32 %v1550, %v1878
      %v1880 = vpop.f32.mrf.mxu0
      %v1881 = vadd.f32 %v1552, %v1880
      %1882 = vmatmul.bf16.gmra.mxu0 %v1229
      %v1883 = vpop.f32.mrf.mxu0
      %v1884 = vadd.f32 %v1555, %v1883
      %v1885 = vpop.f32.mrf.mxu0
      %v1886 = vadd.f32 %v1557, %v1885
      %1887 = vmatmul.bf16.gmra.mxu0 %v1232
      %v1888 = vpop.f32.mrf.mxu0
      %v1889 = vadd.f32 %v1560, %v1888
      %v1890 = vpop.f32.mrf.mxu0
      %v1891 = vadd.f32 %v1562, %v1890
      %1892 = vmatmul.bf16.gmra.mxu0 %v1235
      %v1893 = vpop.f32.mrf.mxu0
      %v1894 = vadd.f32 %v1565, %v1893
      %v1895 = vpop.f32.mrf.mxu0
      %v1896 = vadd.f32 %v1567, %v1895
      %1897 = vmatmul.bf16.gmra.mxu0 %v1238
      %v1898 = vpop.f32.mrf.mxu0
      %v1899 = vadd.f32 %v1570, %v1898
      %v1900 = vpop.f32.mrf.mxu0
      %v1901 = vadd.f32 %v1572, %v1900
      %1902 = vmatmul.bf16.gmra.mxu0 %v1241
      %v1903 = vpop.f32.mrf.mxu0
      %v1904 = vadd.f32 %v1575, %v1903
      %v1905 = vpop.f32.mrf.mxu0
      %v1906 = vadd.f32 %v1577, %v1905
      %1907 = vdwg.mxu0
      %v1908 = vld [vmem:[%s256] sm:$0x1]
      %v1910 = vperm.slane %v1908, 0
      %v1912 = vmul.f32 %v1589, %v1910
      %v1913 = vmul.f32 %v1591, %v1910
      %v1914 = vmul.f32 %v1594, %v1910
      %v1915 = vmul.f32 %v1596, %v1910
      %v1916 = vmul.f32 %v1599, %v1910
      %v1917 = vmul.f32 %v1601, %v1910
      %v1918 = vmul.f32 %v1604, %v1910
      %v1919 = vmul.f32 %v1606, %v1910
      %v1920 = vmul.f32 %v1609, %v1910
      %v1921 = vmul.f32 %v1611, %v1910
      %v1922 = vmul.f32 %v1614, %v1910
      %v1923 = vmul.f32 %v1616, %v1910
      %v1924 = vmul.f32 %v1619, %v1910
      %v1925 = vmul.f32 %v1621, %v1910
      %v1926 = vmul.f32 %v1624, %v1910
      %v1927 = vmul.f32 %v1626, %v1910
      %v1928 = vmul.f32 %v1629, %v1910
      %v1929 = vmul.f32 %v1631, %v1910
      %v1930 = vmul.f32 %v1634, %v1910
      %v1931 = vmul.f32 %v1636, %v1910
      %v1932 = vmul.f32 %v1639, %v1910
      %v1933 = vmul.f32 %v1641, %v1910
      %v1934 = vmul.f32 %v1644, %v1910
      %v1935 = vmul.f32 %v1646, %v1910
      %v1936 = vmul.f32 %v1649, %v1910
      %v1937 = vmul.f32 %v1651, %v1910
      %v1938 = vmul.f32 %v1654, %v1910
      %v1939 = vmul.f32 %v1656, %v1910
      %v1940 = vmul.f32 %v1659, %v1910
      %v1941 = vmul.f32 %v1661, %v1910
      %v1942 = vmul.f32 %v1664, %v1910
      %v1943 = vmul.f32 %v1666, %v1910
      %v1944 = vmul.f32 %v1669, %v1910
      %v1945 = vmul.f32 %v1671, %v1910
      %v1946 = vmul.f32 %v1674, %v1910
      %v1947 = vmul.f32 %v1676, %v1910
      %v1948 = vmul.f32 %v1679, %v1910
      %v1949 = vmul.f32 %v1681, %v1910
      %v1950 = vmul.f32 %v1684, %v1910
      %v1951 = vmul.f32 %v1686, %v1910
      %v1952 = vmul.f32 %v1689, %v1910
      %v1953 = vmul.f32 %v1691, %v1910
      %v1954 = vmul.f32 %v1694, %v1910
      %v1955 = vmul.f32 %v1696, %v1910
      %v1956 = vmul.f32 %v1699, %v1910
      %v1957 = vmul.f32 %v1701, %v1910
      %v1958 = vmul.f32 %v1704, %v1910
      %v1959 = vmul.f32 %v1706, %v1910
      %v1960 = vmul.f32 %v1709, %v1910
      %v1961 = vmul.f32 %v1711, %v1910
      %v1962 = vmul.f32 %v1714, %v1910
      %v1963 = vmul.f32 %v1716, %v1910
      %v1964 = vmul.f32 %v1719, %v1910
      %v1965 = vmul.f32 %v1721, %v1910
      %v1966 = vmul.f32 %v1724, %v1910
      %v1967 = vmul.f32 %v1726, %v1910
      %v1968 = vmul.f32 %v1729, %v1910
      %v1969 = vmul.f32 %v1731, %v1910
      %v1970 = vmul.f32 %v1734, %v1910
      %v1971 = vmul.f32 %v1736, %v1910
      %v1972 = vmul.f32 %v1739, %v1910
      %v1973 = vmul.f32 %v1741, %v1910
      %v1974 = vmul.f32 %v1744, %v1910
      %v1975 = vmul.f32 %v1746, %v1910
      %v1976 = vmul.f32 %v1749, %v1910
      %v1977 = vmul.f32 %v1751, %v1910
      %v1978 = vmul.f32 %v1754, %v1910
      %v1979 = vmul.f32 %v1756, %v1910
      %v1980 = vmul.f32 %v1759, %v1910
      %v1981 = vmul.f32 %v1761, %v1910
      %v1982 = vmul.f32 %v1764, %v1910
      %v1983 = vmul.f32 %v1766, %v1910
      %v1984 = vmul.f32 %v1769, %v1910
      %v1985 = vmul.f32 %v1771, %v1910
      %v1986 = vmul.f32 %v1774, %v1910
      %v1987 = vmul.f32 %v1776, %v1910
      %v1988 = vmul.f32 %v1779, %v1910
      %v1989 = vmul.f32 %v1781, %v1910
      %v1990 = vmul.f32 %v1784, %v1910
      %v1991 = vmul.f32 %v1786, %v1910
      %v1992 = vmul.f32 %v1789, %v1910
      %v1993 = vmul.f32 %v1791, %v1910
      %v1994 = vmul.f32 %v1794, %v1910
      %v1995 = vmul.f32 %v1796, %v1910
      %v1996 = vmul.f32 %v1799, %v1910
      %v1997 = vmul.f32 %v1801, %v1910
      %v1998 = vmul.f32 %v1804, %v1910
      %v1999 = vmul.f32 %v1806, %v1910
      %v2000 = vmul.f32 %v1809, %v1910
      %v2001 = vmul.f32 %v1811, %v1910
      %v2002 = vmul.f32 %v1814, %v1910
      %v2003 = vmul.f32 %v1816, %v1910
      %v2004 = vmul.f32 %v1819, %v1910
      %v2005 = vmul.f32 %v1821, %v1910
      %v2006 = vmul.f32 %v1824, %v1910
      %v2007 = vmul.f32 %v1826, %v1910
      %v2008 = vmul.f32 %v1829, %v1910
      %v2009 = vmul.f32 %v1831, %v1910
      %v2010 = vmul.f32 %v1834, %v1910
      %v2011 = vmul.f32 %v1836, %v1910
      %v2012 = vmul.f32 %v1839, %v1910
      %v2013 = vmul.f32 %v1841, %v1910
      %v2014 = vmul.f32 %v1844, %v1910
      %v2015 = vmul.f32 %v1846, %v1910
      %v2016 = vmul.f32 %v1849, %v1910
      %v2017 = vmul.f32 %v1851, %v1910
      %v2018 = vmul.f32 %v1854, %v1910
      %v2019 = vmul.f32 %v1856, %v1910
      %v2020 = vmul.f32 %v1859, %v1910
      %v2021 = vmul.f32 %v1861, %v1910
      %v2022 = vmul.f32 %v1864, %v1910
      %v2023 = vmul.f32 %v1866, %v1910
      %v2024 = vmul.f32 %v1869, %v1910
      %v2025 = vmul.f32 %v1871, %v1910
      %v2026 = vmul.f32 %v1874, %v1910
      %v2027 = vmul.f32 %v1876, %v1910
      %v2028 = vmul.f32 %v1879, %v1910
      %v2029 = vmul.f32 %v1881, %v1910
      %v2030 = vmul.f32 %v1884, %v1910
      %v2031 = vmul.f32 %v1886, %v1910
      %v2032 = vmul.f32 %v1889, %v1910
      %v2033 = vmul.f32 %v1891, %v1910
      %v2034 = vmul.f32 %v1894, %v1910
      %v2035 = vmul.f32 %v1896, %v1910
      %v2036 = vmul.f32 %v1899, %v1910
      %v2037 = vmul.f32 %v1901, %v1910
      %v2038 = vmul.f32 %v1904, %v1910
      %v2039 = vmul.f32 %v1906, %v1910
      %v2040 = vld [vmem:[%s259] sm:$0x1]
      %v2042 = vperm.slane %v2040, 0
      %v2044 = vadd.f32 %v1912, %v2042
      %v2045 = vadd.f32 %v1913, %v2042
      %v2046 = vadd.f32 %v1914, %v2042
      %v2047 = vadd.f32 %v1915, %v2042
      %v2048 = vadd.f32 %v1916, %v2042
      %v2049 = vadd.f32 %v1917, %v2042
      %v2050 = vadd.f32 %v1918, %v2042
      %v2051 = vadd.f32 %v1919, %v2042
      %v2052 = vadd.f32 %v1920, %v2042
      %v2053 = vadd.f32 %v1921, %v2042
      %v2054 = vadd.f32 %v1922, %v2042
      %v2055 = vadd.f32 %v1923, %v2042
      %v2056 = vadd.f32 %v1924, %v2042
      %v2057 = vadd.f32 %v1925, %v2042
      %v2058 = vadd.f32 %v1926, %v2042
      %v2059 = vadd.f32 %v1927, %v2042
      %v2060 = vadd.f32 %v1928, %v2042
      %v2061 = vadd.f32 %v1929, %v2042
      %v2062 = vadd.f32 %v1930, %v2042
      %v2063 = vadd.f32 %v1931, %v2042
      %v2064 = vadd.f32 %v1932, %v2042
      %v2065 = vadd.f32 %v1933, %v2042
      %v2066 = vadd.f32 %v1934, %v2042
      %v2067 = vadd.f32 %v1935, %v2042
      %v2068 = vadd.f32 %v1936, %v2042
      %v2069 = vadd.f32 %v1937, %v2042
      %v2070 = vadd.f32 %v1938, %v2042
      %v2071 = vadd.f32 %v1939, %v2042
      %v2072 = vadd.f32 %v1940, %v2042
      %v2073 = vadd.f32 %v1941, %v2042
      %v2074 = vadd.f32 %v1942, %v2042
      %v2075 = vadd.f32 %v1943, %v2042
      %v2076 = vadd.f32 %v1944, %v2042
      %v2077 = vadd.f32 %v1945, %v2042
      %v2078 = vadd.f32 %v1946, %v2042
      %v2079 = vadd.f32 %v1947, %v2042
      %v2080 = vadd.f32 %v1948, %v2042
      %v2081 = vadd.f32 %v1949, %v2042
      %v2082 = vadd.f32 %v1950, %v2042
      %v2083 = vadd.f32 %v1951, %v2042
      %v2084 = vadd.f32 %v1952, %v2042
      %v2085 = vadd.f32 %v1953, %v2042
      %v2086 = vadd.f32 %v1954, %v2042
      %v2087 = vadd.f32 %v1955, %v2042
      %v2088 = vadd.f32 %v1956, %v2042
      %v2089 = vadd.f32 %v1957, %v2042
      %v2090 = vadd.f32 %v1958, %v2042
      %v2091 = vadd.f32 %v1959, %v2042
      %v2092 = vadd.f32 %v1960, %v2042
      %v2093 = vadd.f32 %v1961, %v2042
      %v2094 = vadd.f32 %v1962, %v2042
      %v2095 = vadd.f32 %v1963, %v2042
      %v2096 = vadd.f32 %v1964, %v2042
      %v2097 = vadd.f32 %v1965, %v2042
      %v2098 = vadd.f32 %v1966, %v2042
      %v2099 = vadd.f32 %v1967, %v2042
      %v2100 = vadd.f32 %v1968, %v2042
      %v2101 = vadd.f32 %v1969, %v2042
      %v2102 = vadd.f32 %v1970, %v2042
      %v2103 = vadd.f32 %v1971, %v2042
      %v2104 = vadd.f32 %v1972, %v2042
      %v2105 = vadd.f32 %v1973, %v2042
      %v2106 = vadd.f32 %v1974, %v2042
      %v2107 = vadd.f32 %v1975, %v2042
      %v2108 = vadd.f32 %v1976, %v2042
      %v2109 = vadd.f32 %v1977, %v2042
      %v2110 = vadd.f32 %v1978, %v2042
      %v2111 = vadd.f32 %v1979, %v2042
      %v2112 = vadd.f32 %v1980, %v2042
      %v2113 = vadd.f32 %v1981, %v2042
      %v2114 = vadd.f32 %v1982, %v2042
      %v2115 = vadd.f32 %v1983, %v2042
      %v2116 = vadd.f32 %v1984, %v2042
      %v2117 = vadd.f32 %v1985, %v2042
      %v2118 = vadd.f32 %v1986, %v2042
      %v2119 = vadd.f32 %v1987, %v2042
      %v2120 = vadd.f32 %v1988, %v2042
      %v2121 = vadd.f32 %v1989, %v2042
      %v2122 = vadd.f32 %v1990, %v2042
      %v2123 = vadd.f32 %v1991, %v2042
      %v2124 = vadd.f32 %v1992, %v2042
      %v2125 = vadd.f32 %v1993, %v2042
      %v2126 = vadd.f32 %v1994, %v2042
      %v2127 = vadd.f32 %v1995, %v2042
      %v2128 = vadd.f32 %v1996, %v2042
      %v2129 = vadd.f32 %v1997, %v2042
      %v2130 = vadd.f32 %v1998, %v2042
      %v2131 = vadd.f32 %v1999, %v2042
      %v2132 = vadd.f32 %v2000, %v2042
      %v2133 = vadd.f32 %v2001, %v2042
      %v2134 = vadd.f32 %v2002, %v2042
      %v2135 = vadd.f32 %v2003, %v2042
      %v2136 = vadd.f32 %v2004, %v2042
      %v2137 = vadd.f32 %v2005, %v2042
      %v2138 = vadd.f32 %v2006, %v2042
      %v2139 = vadd.f32 %v2007, %v2042
      %v2140 = vadd.f32 %v2008, %v2042
      %v2141 = vadd.f32 %v2009, %v2042
      %v2142 = vadd.f32 %v2010, %v2042
      %v2143 = vadd.f32 %v2011, %v2042
      %v2144 = vadd.f32 %v2012, %v2042
      %v2145 = vadd.f32 %v2013, %v2042
      %v2146 = vadd.f32 %v2014, %v2042
      %v2147 = vadd.f32 %v2015, %v2042
      %v2148 = vadd.f32 %v2016, %v2042
      %v2149 = vadd.f32 %v2017, %v2042
      %v2150 = vadd.f32 %v2018, %v2042
      %v2151 = vadd.f32 %v2019, %v2042
      %v2152 = vadd.f32 %v2020, %v2042
      %v2153 = vadd.f32 %v2021, %v2042
      %v2154 = vadd.f32 %v2022, %v2042
      %v2155 = vadd.f32 %v2023, %v2042
      %v2156 = vadd.f32 %v2024, %v2042
      %v2157 = vadd.f32 %v2025, %v2042
      %v2158 = vadd.f32 %v2026, %v2042
      %v2159 = vadd.f32 %v2027, %v2042
      %v2160 = vadd.f32 %v2028, %v2042
      %v2161 = vadd.f32 %v2029, %v2042
      %v2162 = vadd.f32 %v2030, %v2042
      %v2163 = vadd.f32 %v2031, %v2042
      %v2164 = vadd.f32 %v2032, %v2042
      %v2165 = vadd.f32 %v2033, %v2042
      %v2166 = vadd.f32 %v2034, %v2042
      %v2167 = vadd.f32 %v2035, %v2042
      %v2168 = vadd.f32 %v2036, %v2042
      %v2169 = vadd.f32 %v2037, %v2042
      %v2170 = vadd.f32 %v2038, %v2042
      %v2171 = vadd.f32 %v2039, %v2042
      %v2172 = vmax.f32 %v2044, 0.0
      %v2173 = vmax.f32 %v2045, 0.0
      %v2174 = vmax.f32 %v2046, 0.0
      %v2175 = vmax.f32 %v2047, 0.0
      %v2176 = vmax.f32 %v2048, 0.0
      %v2177 = vmax.f32 %v2049, 0.0
      %v2178 = vmax.f32 %v2050, 0.0
      %v2179 = vmax.f32 %v2051, 0.0
      %v2180 = vmax.f32 %v2052, 0.0
      %v2181 = vmax.f32 %v2053, 0.0
      %v2182 = vmax.f32 %v2054, 0.0
      %v2183 = vmax.f32 %v2055, 0.0
      %v2184 = vmax.f32 %v2056, 0.0
      %v2185 = vmax.f32 %v2057, 0.0
      %v2186 = vmax.f32 %v2058, 0.0
      %v2187 = vmax.f32 %v2059, 0.0
      %v2188 = vmax.f32 %v2060, 0.0
      %v2189 = vmax.f32 %v2061, 0.0
      %v2190 = vmax.f32 %v2062, 0.0
      %v2191 = vmax.f32 %v2063, 0.0
      %v2192 = vmax.f32 %v2064, 0.0
      %v2193 = vmax.f32 %v2065, 0.0
      %v2194 = vmax.f32 %v2066, 0.0
      %v2195 = vmax.f32 %v2067, 0.0
      %v2196 = vmax.f32 %v2068, 0.0
      %v2197 = vmax.f32 %v2069, 0.0
      %v2198 = vmax.f32 %v2070, 0.0
      %v2199 = vmax.f32 %v2071, 0.0
      %v2200 = vmax.f32 %v2072, 0.0
      %v2201 = vmax.f32 %v2073, 0.0
      %v2202 = vmax.f32 %v2074, 0.0
      %v2203 = vmax.f32 %v2075, 0.0
      %v2204 = vmax.f32 %v2076, 0.0
      %v2205 = vmax.f32 %v2077, 0.0
      %v2206 = vmax.f32 %v2078, 0.0
      %v2207 = vmax.f32 %v2079, 0.0
      %v2208 = vmax.f32 %v2080, 0.0
      %v2209 = vmax.f32 %v2081, 0.0
      %v2210 = vmax.f32 %v2082, 0.0
      %v2211 = vmax.f32 %v2083, 0.0
      %v2212 = vmax.f32 %v2084, 0.0
      %v2213 = vmax.f32 %v2085, 0.0
      %v2214 = vmax.f32 %v2086, 0.0
      %v2215 = vmax.f32 %v2087, 0.0
      %v2216 = vmax.f32 %v2088, 0.0
      %v2217 = vmax.f32 %v2089, 0.0
      %v2218 = vmax.f32 %v2090, 0.0
      %v2219 = vmax.f32 %v2091, 0.0
      %v2220 = vmax.f32 %v2092, 0.0
      %v2221 = vmax.f32 %v2093, 0.0
      %v2222 = vmax.f32 %v2094, 0.0
      %v2223 = vmax.f32 %v2095, 0.0
      %v2224 = vmax.f32 %v2096, 0.0
      %v2225 = vmax.f32 %v2097, 0.0
      %v2226 = vmax.f32 %v2098, 0.0
      %v2227 = vmax.f32 %v2099, 0.0
      %v2228 = vmax.f32 %v2100, 0.0
      %v2229 = vmax.f32 %v2101, 0.0
      %v2230 = vmax.f32 %v2102, 0.0
      %v2231 = vmax.f32 %v2103, 0.0
      %v2232 = vmax.f32 %v2104, 0.0
      %v2233 = vmax.f32 %v2105, 0.0
      %v2234 = vmax.f32 %v2106, 0.0
      %v2235 = vmax.f32 %v2107, 0.0
      %v2236 = vmax.f32 %v2108, 0.0
      %v2237 = vmax.f32 %v2109, 0.0
      %v2238 = vmax.f32 %v2110, 0.0
      %v2239 = vmax.f32 %v2111, 0.0
      %v2240 = vmax.f32 %v2112, 0.0
      %v2241 = vmax.f32 %v2113, 0.0
      %v2242 = vmax.f32 %v2114, 0.0
      %v2243 = vmax.f32 %v2115, 0.0
      %v2244 = vmax.f32 %v2116, 0.0
      %v2245 = vmax.f32 %v2117, 0.0
      %v2246 = vmax.f32 %v2118, 0.0
      %v2247 = vmax.f32 %v2119, 0.0
      %v2248 = vmax.f32 %v2120, 0.0
      %v2249 = vmax.f32 %v2121, 0.0
      %v2250 = vmax.f32 %v2122, 0.0
      %v2251 = vmax.f32 %v2123, 0.0
      %v2252 = vmax.f32 %v2124, 0.0
      %v2253 = vmax.f32 %v2125, 0.0
      %v2254 = vmax.f32 %v2126, 0.0
      %v2255 = vmax.f32 %v2127, 0.0
      %v2256 = vmax.f32 %v2128, 0.0
      %v2257 = vmax.f32 %v2129, 0.0
      %v2258 = vmax.f32 %v2130, 0.0
      %v2259 = vmax.f32 %v2131, 0.0
      %v2260 = vmax.f32 %v2132, 0.0
      %v2261 = vmax.f32 %v2133, 0.0
      %v2262 = vmax.f32 %v2134, 0.0
      %v2263 = vmax.f32 %v2135, 0.0
      %v2264 = vmax.f32 %v2136, 0.0
      %v2265 = vmax.f32 %v2137, 0.0
      %v2266 = vmax.f32 %v2138, 0.0
      %v2267 = vmax.f32 %v2139, 0.0
      %v2268 = vmax.f32 %v2140, 0.0
      %v2269 = vmax.f32 %v2141, 0.0
      %v2270 = vmax.f32 %v2142, 0.0
      %v2271 = vmax.f32 %v2143, 0.0
      %v2272 = vmax.f32 %v2144, 0.0
      %v2273 = vmax.f32 %v2145, 0.0
      %v2274 = vmax.f32 %v2146, 0.0
      %v2275 = vmax.f32 %v2147, 0.0
      %v2276 = vmax.f32 %v2148, 0.0
      %v2277 = vmax.f32 %v2149, 0.0
      %v2278 = vmax.f32 %v2150, 0.0
      %v2279 = vmax.f32 %v2151, 0.0
      %v2280 = vmax.f32 %v2152, 0.0
      %v2281 = vmax.f32 %v2153, 0.0
      %v2282 = vmax.f32 %v2154, 0.0
      %v2283 = vmax.f32 %v2155, 0.0
      %v2284 = vmax.f32 %v2156, 0.0
      %v2285 = vmax.f32 %v2157, 0.0
      %v2286 = vmax.f32 %v2158, 0.0
      %v2287 = vmax.f32 %v2159, 0.0
      %v2288 = vmax.f32 %v2160, 0.0
      %v2289 = vmax.f32 %v2161, 0.0
      %v2290 = vmax.f32 %v2162, 0.0
      %v2291 = vmax.f32 %v2163, 0.0
      %v2292 = vmax.f32 %v2164, 0.0
      %v2293 = vmax.f32 %v2165, 0.0
      %v2294 = vmax.f32 %v2166, 0.0
      %v2295 = vmax.f32 %v2167, 0.0
      %v2296 = vmax.f32 %v2168, 0.0
      %v2297 = vmax.f32 %v2169, 0.0
      %v2298 = vmax.f32 %v2170, 0.0
      %v2299 = vmax.f32 %v2171, 0.0
      %vm2300 = vcmask 523264
      %2301 = vst.msk [vmem:[%s267] sm:$0xff] %vm2300, %v2172
      %2302 = vst.msk [vmem:[%s267 + $0x8] sm:$0xff] %vm2300, %v2173
      %2303 = vst.msk [vmem:[%s267 + $0x10] sm:$0xff] %vm2300, %v2174
      %2304 = vst.msk [vmem:[%s267 + $0x18] sm:$0xff] %vm2300, %v2175
      %2305 = vst.msk [vmem:[%s267 + $0x20] sm:$0xff] %vm2300, %v2176
      %2306 = vst.msk [vmem:[%s267 + $0x28] sm:$0xff] %vm2300, %v2177
      %2307 = vst.msk [vmem:[%s267 + $0x30] sm:$0xff] %vm2300, %v2178
      %2308 = vst.msk [vmem:[%s267 + $0x38] sm:$0xff] %vm2300, %v2179
      %2309 = vst.msk [vmem:[%s267 + $0x40] sm:$0xff] %vm2300, %v2180
      %2310 = vst.msk [vmem:[%s267 + $0x48] sm:$0xff] %vm2300, %v2181
      %2311 = vst.msk [vmem:[%s267 + $0x50] sm:$0xff] %vm2300, %v2182
      %2312 = vst.msk [vmem:[%s267 + $0x58] sm:$0xff] %vm2300, %v2183
      %2313 = vst.msk [vmem:[%s267 + $0x60] sm:$0xff] %vm2300, %v2184
      %2314 = vst.msk [vmem:[%s267 + $0x68] sm:$0xff] %vm2300, %v2185
      %2315 = vst.msk [vmem:[%s267 + $0x70] sm:$0xff] %vm2300, %v2186
      %2316 = vst.msk [vmem:[%s267 + $0x78] sm:$0xff] %vm2300, %v2187
      %2317 = vst.msk [vmem:[%s267 + $0x80] sm:$0xff] %vm2300, %v2188
      %2318 = vst.msk [vmem:[%s267 + $0x88] sm:$0xff] %vm2300, %v2189
      %2319 = vst.msk [vmem:[%s267 + $0x90] sm:$0xff] %vm2300, %v2190
      %2320 = vst.msk [vmem:[%s267 + $0x98] sm:$0xff] %vm2300, %v2191
      %2321 = vst.msk [vmem:[%s267 + $0xa0] sm:$0xff] %vm2300, %v2192
      %2322 = vst.msk [vmem:[%s267 + $0xa8] sm:$0xff] %vm2300, %v2193
      %2323 = vst.msk [vmem:[%s267 + $0xb0] sm:$0xff] %vm2300, %v2194
      %2324 = vst.msk [vmem:[%s267 + $0xb8] sm:$0xff] %vm2300, %v2195
      %2325 = vst.msk [vmem:[%s267 + $0xc0] sm:$0xff] %vm2300, %v2196
      %2326 = vst.msk [vmem:[%s267 + $0xc8] sm:$0xff] %vm2300, %v2197
      %2327 = vst.msk [vmem:[%s267 + $0xd0] sm:$0xff] %vm2300, %v2198
      %2328 = vst.msk [vmem:[%s267 + $0xd8] sm:$0xff] %vm2300, %v2199
      %2329 = vst.msk [vmem:[%s267 + $0xe0] sm:$0xff] %vm2300, %v2200
      %2330 = vst.msk [vmem:[%s267 + $0xe8] sm:$0xff] %vm2300, %v2201
      %2331 = vst.msk [vmem:[%s267 + $0xf0] sm:$0xff] %vm2300, %v2202
      %2332 = vst.msk [vmem:[%s267 + $0xf8] sm:$0xff] %vm2300, %v2203
      %2333 = vst.msk [vmem:[%s267 + $0x100] sm:$0xff] %vm2300, %v2204
      %2334 = vst.msk [vmem:[%s267 + $0x108] sm:$0xff] %vm2300, %v2205
      %2335 = vst.msk [vmem:[%s267 + $0x110] sm:$0xff] %vm2300, %v2206
      %2336 = vst.msk [vmem:[%s267 + $0x118] sm:$0xff] %vm2300, %v2207
      %2337 = vst.msk [vmem:[%s267 + $0x120] sm:$0xff] %vm2300, %v2208
      %2338 = vst.msk [vmem:[%s267 + $0x128] sm:$0xff] %vm2300, %v2209
      %2339 = vst.msk [vmem:[%s267 + $0x130] sm:$0xff] %vm2300, %v2210
      %2340 = vst.msk [vmem:[%s267 + $0x138] sm:$0xff] %vm2300, %v2211
      %2341 = vst.msk [vmem:[%s267 + $0x140] sm:$0xff] %vm2300, %v2212
      %2342 = vst.msk [vmem:[%s267 + $0x148] sm:$0xff] %vm2300, %v2213
      %2343 = vst.msk [vmem:[%s267 + $0x150] sm:$0xff] %vm2300, %v2214
      %2344 = vst.msk [vmem:[%s267 + $0x158] sm:$0xff] %vm2300, %v2215
      %2345 = vst.msk [vmem:[%s267 + $0x160] sm:$0xff] %vm2300, %v2216
      %2346 = vst.msk [vmem:[%s267 + $0x168] sm:$0xff] %vm2300, %v2217
      %2347 = vst.msk [vmem:[%s267 + $0x170] sm:$0xff] %vm2300, %v2218
      %2348 = vst.msk [vmem:[%s267 + $0x178] sm:$0xff] %vm2300, %v2219
      %2349 = vst.msk [vmem:[%s267 + $0x180] sm:$0xff] %vm2300, %v2220
      %2350 = vst.msk [vmem:[%s267 + $0x188] sm:$0xff] %vm2300, %v2221
      %2351 = vst.msk [vmem:[%s267 + $0x190] sm:$0xff] %vm2300, %v2222
      %2352 = vst.msk [vmem:[%s267 + $0x198] sm:$0xff] %vm2300, %v2223
      %2353 = vst.msk [vmem:[%s267 + $0x1a0] sm:$0xff] %vm2300, %v2224
      %2354 = vst.msk [vmem:[%s267 + $0x1a8] sm:$0xff] %vm2300, %v2225
      %2355 = vst.msk [vmem:[%s267 + $0x1b0] sm:$0xff] %vm2300, %v2226
      %2356 = vst.msk [vmem:[%s267 + $0x1b8] sm:$0xff] %vm2300, %v2227
      %2357 = vst.msk [vmem:[%s267 + $0x1c0] sm:$0xff] %vm2300, %v2228
      %2358 = vst.msk [vmem:[%s267 + $0x1c8] sm:$0xff] %vm2300, %v2229
      %2359 = vst.msk [vmem:[%s267 + $0x1d0] sm:$0xff] %vm2300, %v2230
      %2360 = vst.msk [vmem:[%s267 + $0x1d8] sm:$0xff] %vm2300, %v2231
      %2361 = vst.msk [vmem:[%s267 + $0x1e0] sm:$0xff] %vm2300, %v2232
      %2362 = vst.msk [vmem:[%s267 + $0x1e8] sm:$0xff] %vm2300, %v2233
      %2363 = vst.msk [vmem:[%s267 + $0x1f0] sm:$0xff] %vm2300, %v2234
      %2364 = vst.msk [vmem:[%s267 + $0x1f8] sm:$0xff] %vm2300, %v2235
      %2365 = vst.msk [vmem:[%s267 + $0x200] sm:$0xff] %vm2300, %v2236
      %2366 = vst.msk [vmem:[%s267 + $0x208] sm:$0xff] %vm2300, %v2237
      %2367 = vst.msk [vmem:[%s267 + $0x210] sm:$0xff] %vm2300, %v2238
      %2368 = vst.msk [vmem:[%s267 + $0x218] sm:$0xff] %vm2300, %v2239
      %2369 = vst.msk [vmem:[%s267 + $0x220] sm:$0xff] %vm2300, %v2240
      %2370 = vst.msk [vmem:[%s267 + $0x228] sm:$0xff] %vm2300, %v2241
      %2371 = vst.msk [vmem:[%s267 + $0x230] sm:$0xff] %vm2300, %v2242
      %2372 = vst.msk [vmem:[%s267 + $0x238] sm:$0xff] %vm2300, %v2243
      %2373 = vst.msk [vmem:[%s267 + $0x240] sm:$0xff] %vm2300, %v2244
      %2374 = vst.msk [vmem:[%s267 + $0x248] sm:$0xff] %vm2300, %v2245
      %2375 = vst.msk [vmem:[%s267 + $0x250] sm:$0xff] %vm2300, %v2246
      %2376 = vst.msk [vmem:[%s267 + $0x258] sm:$0xff] %vm2300, %v2247
      %2377 = vst.msk [vmem:[%s267 + $0x260] sm:$0xff] %vm2300, %v2248
      %2378 = vst.msk [vmem:[%s267 + $0x268] sm:$0xff] %vm2300, %v2249
      %2379 = vst.msk [vmem:[%s267 + $0x270] sm:$0xff] %vm2300, %v2250
      %2380 = vst.msk [vmem:[%s267 + $0x278] sm:$0xff] %vm2300, %v2251
      %2381 = vst.msk [vmem:[%s267 + $0x280] sm:$0xff] %vm2300, %v2252
      %2382 = vst.msk [vmem:[%s267 + $0x288] sm:$0xff] %vm2300, %v2253
      %2383 = vst.msk [vmem:[%s267 + $0x290] sm:$0xff] %vm2300, %v2254
      %2384 = vst.msk [vmem:[%s267 + $0x298] sm:$0xff] %vm2300, %v2255
      %2385 = vst.msk [vmem:[%s267 + $0x2a0] sm:$0xff] %vm2300, %v2256
      %2386 = vst.msk [vmem:[%s267 + $0x2a8] sm:$0xff] %vm2300, %v2257
      %2387 = vst.msk [vmem:[%s267 + $0x2b0] sm:$0xff] %vm2300, %v2258
      %2388 = vst.msk [vmem:[%s267 + $0x2b8] sm:$0xff] %vm2300, %v2259
      %2389 = vst.msk [vmem:[%s267 + $0x2c0] sm:$0xff] %vm2300, %v2260
      %2390 = vst.msk [vmem:[%s267 + $0x2c8] sm:$0xff] %vm2300, %v2261
      %2391 = vst.msk [vmem:[%s267 + $0x2d0] sm:$0xff] %vm2300, %v2262
      %2392 = vst.msk [vmem:[%s267 + $0x2d8] sm:$0xff] %vm2300, %v2263
      %2393 = vst.msk [vmem:[%s267 + $0x2e0] sm:$0xff] %vm2300, %v2264
      %2394 = vst.msk [vmem:[%s267 + $0x2e8] sm:$0xff] %vm2300, %v2265
      %2395 = vst.msk [vmem:[%s267 + $0x2f0] sm:$0xff] %vm2300, %v2266
      %2396 = vst.msk [vmem:[%s267 + $0x2f8] sm:$0xff] %vm2300, %v2267
      %2397 = vst.msk [vmem:[%s267 + $0x300] sm:$0xff] %vm2300, %v2268
      %2398 = vst.msk [vmem:[%s267 + $0x308] sm:$0xff] %vm2300, %v2269
      %2399 = vst.msk [vmem:[%s267 + $0x310] sm:$0xff] %vm2300, %v2270
      %2400 = vst.msk [vmem:[%s267 + $0x318] sm:$0xff] %vm2300, %v2271
      %2401 = vst.msk [vmem:[%s267 + $0x320] sm:$0xff] %vm2300, %v2272
      %2402 = vst.msk [vmem:[%s267 + $0x328] sm:$0xff] %vm2300, %v2273
      %2403 = vst.msk [vmem:[%s267 + $0x330] sm:$0xff] %vm2300, %v2274
      %2404 = vst.msk [vmem:[%s267 + $0x338] sm:$0xff] %vm2300, %v2275
      %2405 = vst.msk [vmem:[%s267 + $0x340] sm:$0xff] %vm2300, %v2276
      %2406 = vst.msk [vmem:[%s267 + $0x348] sm:$0xff] %vm2300, %v2277
      %2407 = vst.msk [vmem:[%s267 + $0x350] sm:$0xff] %vm2300, %v2278
      %2408 = vst.msk [vmem:[%s267 + $0x358] sm:$0xff] %vm2300, %v2279
      %2409 = vst.msk [vmem:[%s267 + $0x360] sm:$0xff] %vm2300, %v2280
      %2410 = vst.msk [vmem:[%s267 + $0x368] sm:$0xff] %vm2300, %v2281
      %2411 = vst.msk [vmem:[%s267 + $0x370] sm:$0xff] %vm2300, %v2282
      %2412 = vst.msk [vmem:[%s267 + $0x378] sm:$0xff] %vm2300, %v2283
      %2413 = vst.msk [vmem:[%s267 + $0x380] sm:$0xff] %vm2300, %v2284
      %2414 = vst.msk [vmem:[%s267 + $0x388] sm:$0xff] %vm2300, %v2285
      %2415 = vst.msk [vmem:[%s267 + $0x390] sm:$0xff] %vm2300, %v2286
      %2416 = vst.msk [vmem:[%s267 + $0x398] sm:$0xff] %vm2300, %v2287
      %2417 = vst.msk [vmem:[%s267 + $0x3a0] sm:$0xff] %vm2300, %v2288
      %2418 = vst.msk [vmem:[%s267 + $0x3a8] sm:$0xff] %vm2300, %v2289
      %2419 = vst.msk [vmem:[%s267 + $0x3b0] sm:$0xff] %vm2300, %v2290
      %2420 = vst.msk [vmem:[%s267 + $0x3b8] sm:$0xff] %vm2300, %v2291
      %2421 = vst.msk [vmem:[%s267 + $0x3c0] sm:$0xff] %vm2300, %v2292
      %2422 = vst.msk [vmem:[%s267 + $0x3c8] sm:$0xff] %vm2300, %v2293
      %2423 = vst.msk [vmem:[%s267 + $0x3d0] sm:$0xff] %vm2300, %v2294
      %2424 = vst.msk [vmem:[%s267 + $0x3d8] sm:$0xff] %vm2300, %v2295
      %2425 = vst.msk [vmem:[%s267 + $0x3e0] sm:$0xff] %vm2300, %v2296
      %2426 = vst.msk [vmem:[%s267 + $0x3e8] sm:$0xff] %vm2300, %v2297
      %2427 = vst.msk [vmem:[%s267 + $0x3f0] sm:$0xff] %vm2300, %v2298
      %2428 = vst.msk [vmem:[%s267 + $0x3f8] sm:$0xff] %vm2300, %v2299
      %s2429 = smul.u32 128, %s19
      %p2430 = scmp.lt.s32.totalorder %s2429, 6271
      %s2431 = scalar_select %p2430, %s2429, 6271
      %p2432 = scmp.lt.s32.totalorder %s20, 0
      %s2433 = scalar_select %p2432, %s20, 0
      %s2434 = sadd.s32 %s2433, %s2431
      %s2435 = smul.addr %s2434, 8
      %s2436 = scalar_lea.vmem %s4, %s2435
      // Predicated region
      $region37: #{conv2d.1} parent=35 // pred_check
        %p2437 = pneg %p151
      $region38: #{conv2d.1} parent=35 // pred_check_branch
        %2439 = sbr.rel (%p2437) target = $region40
      $region39: #{conv2d.1} parent=35 // pred_region
        %s2440 = smul.u32 128, %s19
      $region40: #{conv2d.1} parent=35 // pred_fallthru
        _
    $region36: #{conv2d.1} parent=5 // pred_fallthru
      _
    %p2441 = scmp.le.s32.totalorder 2, %s10
    // Predicated region
    $region41: #{conv2d.1} parent=5 // pred_check
      %p2442 = pneg %p2441
    $region42: #{conv2d.1} parent=5 // pred_check_branch
      %2444 = sbr.rel (%p2442) target = $region44
    $region43: #{conv2d.1} parent=5 // pred_region
      %s2445 = ssub.s32 %s10, 2
      // Predicated region
      $region45: #{conv2d.1} parent=43 // pred_check
        %p2446 = pneg %p157
      $region46: #{conv2d.1} parent=43 // pred_check_branch
        %2448 = sbr.rel (%p2446) target = $region48
      $region47: #{conv2d.1} parent=43 // pred_region
        %s2449 = smul.u32 128, %s21
        %p2450 = scmp.lt.s32.totalorder %s2449, 6271
        %s2451 = scalar_select %p2450, %s2449, 6271
        %p2452 = scmp.lt.s32.totalorder %s22, 0
        %s2453 = scalar_select %p2452, %s22, 0
        %s2454 = sadd.s32 %s2453, %s2451
        %s2455 = smul.addr %s2454, 8
        %s2456 = scalar_lea.vmem %s4, %s2455
      $region48: #{conv2d.1} parent=43 // pred_fallthru
        _
    $region44: #{conv2d.1} parent=5 // pred_fallthru
      _
  $region6: #{conv2d.1} parent=0 // loop_footer
    %s14 = sadd.s32 1, %s10
  $region7: #{conv2d.1} parent=0 // loop_footer_branch
    %9 = sbr.rel target = $region3
  $region8: #{conv2d.1} parent=0 // loop_exit
    _

</llo_original>
